<compile_context>
chip_gen: v7x
topology: tpu7x:2x2x1
jax: 0.10.0
libtpu: 0.0.40
codegen_flags: <defaults>
</compile_context>

<pallas_src>
import functools

import jax
import jax.numpy as jnp
from jax.experimental import pallas as pl
from jax.experimental.pallas import tpu as pltpu


def _round_up(x, m):
    return ((x + m - 1) // m) * m


def _pad_axis(x, target, axis):
    pad = target - x.shape[axis]
    if pad == 0:
        return x
    widths = [(0, 0)] * x.ndim
    widths[axis] = (0, pad)
    return jnp.pad(x, widths)


def _vmem_budget_bytes():
    """Generation-aware VMEM budget with headroom below physical capacity."""
    try:
        cap = int(pltpu.get_tpu_info().vmem_capacity_bytes)
    except Exception:  # unknown chip / interpret mode: be conservative
        cap = 64 << 20
    # v7x: 64 MiB physical -> ~48 MiB usable; v5e/v6e: 128 MiB -> ~112 MiB.
    return int(min(max(cap - (16 << 20), 32 << 20), 112 << 20))


def _select_tiles(B, S, D, Dv, q_item, k_item, v_item, o_item, has_mask,
                  budget, block_b, block_s):
    """Pick (bb, bs): biggest tiles that fit the VMEM budget, >=2 batch blocks
    when possible (v7x has 2 TensorCores sharing the 'parallel' batch axis)."""
    B8 = _round_up(B, 8)
    S8 = _round_up(S, 8)

    bb = max(8, min(_round_up(block_b, 8), B8))
    if B8 >= 16:  # keep grid[0] >= 2 so both v7x TensorCores get work
        bb = min(bb, max(8, (B8 // 2) // 8 * 8))
    # Among multiples of 8 <= bb, minimise batch zero-padding (prefer larger).
    best, best_pad = bb, _round_up(B8, bb)
    for cand in range(bb - 8, 7, -8):
        p = _round_up(B8, cand)
        if p < best_pad:
            best, best_pad = cand, p
    bb = best

    row_bytes = D * k_item + Dv * v_item + (1 if has_mask else 0)

    def fits(bb_, bs_):
        stream = 2 * bb_ * bs_ * row_bytes              # double-buffered K/V/mask
        inter = 2 * bb_ * bs_ * D * 4                   # in-kernel f32 temps over K tile
        fixed = 2 * bb_ * (D * q_item + Dv * o_item) + 4 * bb_ * (Dv + 2)
        return stream + inter + fixed + (2 << 20) <= budget

    min_bs = S8 if S8 <= 128 else 128
    while bb > 8 and not fits(bb, min_bs):
        bb = max(8, (bb // 2) // 8 * 8)

    if S8 <= 128:
        bs = S8                                         # one full-S block
    else:
        S128 = _round_up(S8, 128)
        cap = _round_up(min(block_s if block_s else 4096, S128), 128)
        bs = cap
        while bs > 128 and not fits(bb, bs):
            bs -= 128
        # Among feasible multiples of 128 >= bs/2, minimise S zero-padding.
        lo = max(128, (bs // 2) // 128 * 128)
        best, best_pad = bs, _round_up(S128, bs)
        cand = bs - 128
        while cand >= lo:
            p = _round_up(S128, cand)
            if p < best_pad:
                best, best_pad = cand, p
            cand -= 128
        bs = best
    return bb, bs


def _sim_attention_kernel(*refs, has_mask):
    if has_mask:
        q_ref, k_ref, v_ref, m_ref, o_ref, num_acc, den_acc, qq_sc = refs
    else:
        q_ref, k_ref, v_ref, o_ref, num_acc, den_acc, qq_sc = refs
        m_ref = None

    s_idx = pl.program_id(1)

    @pl.when(s_idx == 0)
    def _init():
        num_acc[...] = jnp.zeros_like(num_acc)
        den_acc[...] = jnp.zeros_like(den_acc)
        # Query-only work hoisted out of the S loop (q is resident across S).
        q32 = q_ref[...].astype(jnp.float32)                        # (bb, 1, D)
        qq_sc[...] = jnp.sum(q32 * q32, axis=-1, keepdims=True)     # (bb, 1, 1)

    k = k_ref[...]                                                  # (bb, bs, D)
    kf = k.astype(jnp.float32)
    # ||k||^2: lane-reduce over D, then lay out lane-dense over S so all
    # score-path math stays (bb, 1, bs). The relayout is XLU work (separate
    # VLIW slot from the VPU/MXU).
    kk = jnp.sum(kf * kf, axis=-1)[:, None, :]                      # (bb, 1, bs)

    # Raw dot via the MXU (batched matmul with query length 1, f32 accumulate).
    # TODO(synk): on v7x, if the bundle shows these M=1 vmatmuls binding,
    # switch to a VPU broadcast-multiply + XLU lane reduce.
    raw = jnp.einsum("bqd,bsd->bqs", q_ref[...], k,
                     preferred_element_type=jnp.float32)            # (bb, 1, bs)

    # Exact cosine: single sqrt of |q|^2*|k|^2, clamp, exact divide. Only the
    # lane-dense (bb,1,bs) scores are scaled — never the full (bb,bs,D) key.
    norm = jnp.sqrt(qq_sc[...] * kk)
    cos = raw / jnp.maximum(norm, 1e-8)

    # Threshold + mask in one fused select. Masked cosines -> 0 and 0 < 0.9,
    # so applying the mask here is equivalent to the reference order. Zero
    # padded keys have |k|=0 -> cos=0 -> dropped, so padding never contributes.
    keep = cos >= 0.9
    if m_ref is not None:
        keep = jnp.logical_and(keep, (m_ref[...] == 0)[:, None, :])
    w = jnp.where(keep, cos, 0.0)                                   # (bb, 1, bs)

    # Linear (non-softmax) normalisation => streaming over S tiles is exact.
    den_acc[...] += jnp.sum(w, axis=-1, keepdims=True)              # (bb, 1, 1)
    num_acc[...] += jnp.einsum("bqs,bsd->bqd",
                               w.astype(v_ref.dtype), v_ref[...],
                               preferred_element_type=jnp.float32)  # (bb, 1, Dv)

    @pl.when(s_idx == pl.num_programs(1) - 1)
    def _finalize():
        # Exact divide: the (bb,1,1) reciprocal is free; approx would only
        # inject error into the whole output scale.
        o_ref[...] = (num_acc[...] / (den_acc[...] + 1e-8)).astype(o_ref.dtype)


def sim_attention(query, key, value, mask=None, *, block_b=64, block_s=None):
    """query: (B, D), key: (B, S, D), value: (B, S, Dv), mask: (B, S) or None."""
    B, D = query.shape
    Bk, S, Dk = key.shape
    assert Bk == B and Dk == D, "key must be (B, S, D)"
    assert value.shape[0] == B and value.shape[1] == S
    Dv = value.shape[-1]
    has_mask = mask is not None

    q_item = jnp.dtype(query.dtype).itemsize
    k_item = jnp.dtype(key.dtype).itemsize
    v_item = jnp.dtype(value.dtype).itemsize
    o_item = v_item

    budget = _vmem_budget_bytes()
    bb, bs = _select_tiles(B, S, D, Dv, q_item, k_item, v_item, o_item,
                           has_mask, budget, block_b, block_s)

    B_pad = _round_up(B, bb)
    S_pad = _round_up(S, bs)

    # Zero padding is semantically safe: padded keys have norm 0 -> cosine 0
    # -> dropped by the 0.9 threshold; padded batch rows are sliced off below.
    q3 = _pad_axis(query, B_pad, 0).reshape(B_pad, 1, D)
    k3 = _pad_axis(_pad_axis(key, B_pad, 0), S_pad, 1)
    v3 = _pad_axis(_pad_axis(value, B_pad, 0), S_pad, 1)

    inputs = [q3, k3, v3]
    in_specs = [
        pl.BlockSpec((bb, 1, D), lambda b, s: (b, 0, 0)),
        pl.BlockSpec((bb, bs, D), lambda b, s: (b, s, 0)),
        pl.BlockSpec((bb, bs, Dv), lambda b, s: (b, s, 0)),
    ]
    if has_mask:
        # Lane-dense 2D int8 mask: S on the 128-lane axis, 1 byte per key.
        m2 = _pad_axis(_pad_axis(mask.astype(jnp.int8), B_pad, 0), S_pad, 1)
        inputs.append(m2)
        in_specs.append(pl.BlockSpec((bb, bs), lambda b, s: (b, s)))

    grid = (B_pad // bb, S_pad // bs)

    grid_spec = pltpu.PrefetchScalarGridSpec(
        num_scalar_prefetch=0,
        grid=grid,
        in_specs=in_specs,
        out_specs=pl.BlockSpec((bb, 1, Dv), lambda b, s: (b, 0, 0)),
        scratch_shapes=[
            pltpu.VMEM((bb, 1, Dv), jnp.float32),   # numerator accumulator
            pltpu.VMEM((bb, 1, 1), jnp.float32),    # denominator accumulator
            pltpu.VMEM((bb, 1, 1), jnp.float32),    # |q|^2 (hoisted per batch block)
        ],
    )

    out3 = pl.pallas_call(
        functools.partial(_sim_attention_kernel, has_mask=has_mask),
        out_shape=jax.ShapeDtypeStruct((B_pad, 1, Dv), value.dtype),
        grid_spec=grid_spec,
        compiler_params=pltpu.CompilerParams(
            dimension_semantics=("parallel", "arbitrary"),
            vmem_limit_bytes=int(budget)),
    )(*inputs)

    return out3.reshape(B_pad, Dv)[:B]


def _reference(query, key, value, mask=None):
    dot = jnp.einsum("bsd,bd->bs", key, query, precision="highest")
    nq = jnp.linalg.norm(query, axis=1)
    nk = jnp.linalg.norm(key, axis=2)
    denom = jnp.maximum(nq[:, None] * nk, 1e-08)
    attn = dot / denom
    if mask is not None:
        attn = jnp.where(mask, 0.0, attn)
    attn = jnp.where(attn < 0.9, 0.0, attn)
    attn = attn / (jnp.sum(attn, axis=1, keepdims=True) + 1e-08)
    return jnp.einsum("bs,bsd->bd", attn, value, precision="highest")


if __name__ == "__main__":
    B, S, D, Dv = 2, 8, 32, 32
    root = jax.random.PRNGKey(0)
    k_q, k_k, k_v = jax.random.split(root, 3)

    query = jax.random.normal(k_q, (B, D), dtype=jnp.float32)
    # Make a couple of keys nearly parallel to the query so the 0.9 cosine
    # threshold keeps some nonzero entries.
    key = jax.random.normal(k_k, (B, S, D), dtype=jnp.float32)
    key = key.at[:, 0, :].set(query * 1.5)
    key = key.at[:, 3, :].set(query * 0.7 + 0.01)
    value = jax.random.normal(k_v, (B, S, Dv), dtype=jnp.float32)
    mask = jnp.zeros((B, S), dtype=bool).at[:, 0].set(True)

    out_nomask = jax.block_until_ready(sim_attention(query, key, value))
    out_masked = jax.block_until_ready(sim_attention(query, key, value, mask=mask))

    ref_nomask = _reference(query, key, value)
    ref_masked = _reference(query, key, value, mask)

    assert out_nomask.shape == (B, Dv) and out_masked.shape == (B, Dv)
    # Kernel math (norms, threshold, normalisation) is exact; tolerance only
    # covers MXU-vs-XLA f32 matmul pass differences.
    assert jnp.allclose(out_nomask, ref_nomask, atol=5e-3, rtol=5e-3), "maskless mismatch"
    assert jnp.allclose(out_masked, ref_masked, atol=5e-3, rtol=5e-3), "masked mismatch"

    print("KERNEL_OK")
</pallas_src>

<mosaic_0001>
module attributes {stable_mosaic.version = 11 : i64} {
  func.func @_sim_attention_kernel(%arg0: i32, %arg1: i32, %arg2: memref<8x1x32xf32, #tpu.memory_space<vmem>>, %arg3: memref<8x8x32xf32, #tpu.memory_space<vmem>>, %arg4: memref<8x8x32xf32, #tpu.memory_space<vmem>>, %arg5: memref<8x1x32xf32, #tpu.memory_space<vmem>>, %arg6: memref<8x1x32xf32, #tpu.memory_space<vmem>>, %arg7: memref<8x1x1xf32, #tpu.memory_space<vmem>>, %arg8: memref<8x1x1xf32, #tpu.memory_space<vmem>>) attributes {dimension_semantics = [#tpu.dimension_semantics<parallel>, #tpu.dimension_semantics<arbitrary>], iteration_bounds = array<i64: 1, 1>, scalar_prefetch = 0 : i64, scratch_operands = 3 : i64, tpu.core_type = #tpu.core_type<tc>, window_params = [{transform_indices = @transform_0, window_bounds = array<i64: 8, 1, 32>}, {transform_indices = @transform_1, window_bounds = array<i64: 8, 8, 32>}, {transform_indices = @transform_2, window_bounds = array<i64: 8, 8, 32>}, {transform_indices = @transform_3, window_bounds = array<i64: 8, 1, 32>}]} {
    %c0_i32 = arith.constant 0 : i32
    %0 = arith.cmpi eq, %arg1, %c0_i32 : i32
    %1 = arith.extui %0 : i1 to i32
    %c0_i32_0 = arith.constant 0 : i32
    %2 = arith.cmpi ne, %1, %c0_i32_0 : i32
    scf.if %2 {
      %cst_32 = arith.constant 0.000000e+00 : f32
      %33 = vector.broadcast %cst_32 : f32 to vector<8x1x32xf32>
      %c0_33 = arith.constant 0 : index
      %c0_34 = arith.constant 0 : index
      %c0_35 = arith.constant 0 : index
      %34 = vector.load %arg6[%c0_33, %c0_34, %c0_35] : memref<8x1x32xf32, #tpu.memory_space<vmem>>, vector<8x1x32xf32>
      tpu.vector_store %arg6[%c0_33, %c0_34, %c0_35], %33 {strides = array<i32>} : memref<8x1x32xf32, #tpu.memory_space<vmem>>, vector<8x1x32xf32>,
      %cst_36 = arith.constant 0.000000e+00 : f32
      %35 = vector.broadcast %cst_36 : f32 to vector<8x1x1xf32>
      %c0_37 = arith.constant 0 : index
      %c0_38 = arith.constant 0 : index
      %c0_39 = arith.constant 0 : index
      %36 = vector.load %arg7[%c0_37, %c0_38, %c0_39] : memref<8x1x1xf32, #tpu.memory_space<vmem>>, vector<8x1x1xf32>
      tpu.vector_store %arg7[%c0_37, %c0_38, %c0_39], %35 {strides = array<i32>} : memref<8x1x1xf32, #tpu.memory_space<vmem>>, vector<8x1x1xf32>,
      %c0_40 = arith.constant 0 : index
      %c0_41 = arith.constant 0 : index
      %c0_42 = arith.constant 0 : index
      %37 = vector.load %arg2[%c0_40, %c0_41, %c0_42] : memref<8x1x32xf32, #tpu.memory_space<vmem>>, vector<8x1x32xf32>
      %38 = arith.mulf %37, %37 : vector<8x1x32xf32>
      %cst_43 = arith.constant dense<0.000000e+00> : vector<8x1xf32>
      %39 = vector.multi_reduction <add>, %38, %cst_43 [2] : vector<8x1x32xf32> to vector<8x1xf32>
      %40 = vector.shape_cast %39 : vector<8x1xf32> to vector<8x1x1xf32>
      %c0_44 = arith.constant 0 : index
      %c0_45 = arith.constant 0 : index
      %c0_46 = arith.constant 0 : index
      %41 = vector.load %arg8[%c0_44, %c0_45, %c0_46] : memref<8x1x1xf32, #tpu.memory_space<vmem>>, vector<8x1x1xf32>
      tpu.vector_store %arg8[%c0_44, %c0_45, %c0_46], %40 {strides = array<i32>} : memref<8x1x1xf32, #tpu.memory_space<vmem>>, vector<8x1x1xf32>,
    } else {
    }
    %c0 = arith.constant 0 : index
    %c0_1 = arith.constant 0 : index
    %c0_2 = arith.constant 0 : index
    %3 = vector.load %arg3[%c0, %c0_1, %c0_2] : memref<8x8x32xf32, #tpu.memory_space<vmem>>, vector<8x8x32xf32>
    %4 = arith.mulf %3, %3 : vector<8x8x32xf32>
    %cst = arith.constant dense<0.000000e+00> : vector<8x8xf32>
    %5 = vector.multi_reduction <add>, %4, %cst [2] : vector<8x8x32xf32> to vector<8x8xf32>
    %6 = vector.shape_cast %5 : vector<8x8xf32> to vector<8x1x8xf32>
    %c0_3 = arith.constant 0 : index
    %c0_4 = arith.constant 0 : index
    %c0_5 = arith.constant 0 : index
    %7 = vector.load %arg2[%c0_3, %c0_4, %c0_5] : memref<8x1x32xf32, #tpu.memory_space<vmem>>, vector<8x1x32xf32>
    "tpu.trace_start"() <{level = 10 : i32, message = "bqd,bsd->bqs"}> : () -> ()
    %cst_6 = arith.constant dense<0.000000e+00> : vector<8x1x8xf32>
    %8 = tpu.matmul %7, %3, %cst_6 {dimension_numbers = #tpu.dot_dimension_numbers<[2], [2], [1], [1], [0, 0, 0, 1, 1, 1], [0], [0]>} : vector<8x1x32xf32>, vector<8x8x32xf32>, vector<8x1x8xf32> -> vector<8x1x8xf32>
    "tpu.trace_stop"() : () -> ()
    %c0_7 = arith.constant 0 : index
    %c0_8 = arith.constant 0 : index
    %c0_9 = arith.constant 0 : index
    %9 = vector.load %arg8[%c0_7, %c0_8, %c0_9] : memref<8x1x1xf32, #tpu.memory_space<vmem>>, vector<8x1x1xf32>
    %10 = vector.broadcast %9 : vector<8x1x1xf32> to vector<8x1x8xf32>
    %11 = arith.mulf %10, %6 : vector<8x1x8xf32>
    %12 = math.sqrt %11 : vector<8x1x8xf32>
    %cst_10 = arith.constant 9.99999993E-9 : f32
    %13 = vector.broadcast %cst_10 : f32 to vector<8x1x8xf32>
    %14 = arith.maximumf %12, %13 : vector<8x1x8xf32>
    %15 = arith.divf %8, %14 : vector<8x1x8xf32>
    %cst_11 = arith.constant 0.899999976 : f32
    %16 = vector.broadcast %cst_11 : f32 to vector<8x1x8xf32>
    %17 = arith.cmpf oge, %15, %16 : vector<8x1x8xf32>
    %cst_12 = arith.constant 0.000000e+00 : f32
    %18 = vector.broadcast %cst_12 : f32 to vector<8x1x8xf32>
    %19 = arith.select %17, %15, %18 : vector<8x1x8xi1>, vector<8x1x8xf32>
    %c0_13 = arith.constant 0 : index
    %c0_14 = arith.constant 0 : index
    %c0_15 = arith.constant 0 : index
    %20 = vector.load %arg7[%c0_13, %c0_14, %c0_15] : memref<8x1x1xf32, #tpu.memory_space<vmem>>, vector<8x1x1xf32>
    %cst_16 = arith.constant dense<0.000000e+00> : vector<8x1xf32>
    %21 = vector.multi_reduction <add>, %19, %cst_16 [2] : vector<8x1x8xf32> to vector<8x1xf32>
    %22 = vector.shape_cast %21 : vector<8x1xf32> to vector<8x1x1xf32>
    %23 = arith.addf %20, %22 : vector<8x1x1xf32>
    %c0_17 = arith.constant 0 : index
    %c0_18 = arith.constant 0 : index
    %c0_19 = arith.constant 0 : index
    %24 = vector.load %arg7[%c0_17, %c0_18, %c0_19] : memref<8x1x1xf32, #tpu.memory_space<vmem>>, vector<8x1x1xf32>
    tpu.vector_store %arg7[%c0_17, %c0_18, %c0_19], %23 {strides = array<i32>} : memref<8x1x1xf32, #tpu.memory_space<vmem>>, vector<8x1x1xf32>,
    %c0_20 = arith.constant 0 : index
    %c0_21 = arith.constant 0 : index
    %c0_22 = arith.constant 0 : index
    %25 = vector.load %arg6[%c0_20, %c0_21, %c0_22] : memref<8x1x32xf32, #tpu.memory_space<vmem>>, vector<8x1x32xf32>
    %c0_23 = arith.constant 0 : index
    %c0_24 = arith.constant 0 : index
    %c0_25 = arith.constant 0 : index
    %26 = vector.load %arg4[%c0_23, %c0_24, %c0_25] : memref<8x8x32xf32, #tpu.memory_space<vmem>>, vector<8x8x32xf32>
    "tpu.trace_start"() <{level = 10 : i32, message = "bqs,bsd->bqd"}> : () -> ()
    %cst_26 = arith.constant dense<0.000000e+00> : vector<8x1x32xf32>
    %27 = tpu.matmul %19, %26, %cst_26 {dimension_numbers = #tpu.dot_dimension_numbers<[2], [1], [1], [2], [0, 0, 0, 1, 1, 2], [0], [0]>} : vector<8x1x8xf32>, vector<8x8x32xf32>, vector<8x1x32xf32> -> vector<8x1x32xf32>
    "tpu.trace_stop"() : () -> ()
    %28 = arith.addf %25, %27 : vector<8x1x32xf32>
    %c0_27 = arith.constant 0 : index
    %c0_28 = arith.constant 0 : index
    %c0_29 = arith.constant 0 : index
    %29 = vector.load %arg6[%c0_27, %c0_28, %c0_29] : memref<8x1x32xf32, #tpu.memory_space<vmem>>, vector<8x1x32xf32>
    tpu.vector_store %arg6[%c0_27, %c0_28, %c0_29], %28 {strides = array<i32>} : memref<8x1x32xf32, #tpu.memory_space<vmem>>, vector<8x1x32xf32>,
    %c0_i32_30 = arith.constant 0 : i32
    %30 = arith.cmpi eq, %arg1, %c0_i32_30 : i32
    %31 = arith.extui %30 : i1 to i32
    %c0_i32_31 = arith.constant 0 : i32
    %32 = arith.cmpi ne, %31, %c0_i32_31 : i32
    scf.if %32 {
      %c0_32 = arith.constant 0 : index
      %c0_33 = arith.constant 0 : index
      %c0_34 = arith.constant 0 : index
      %33 = vector.load %arg6[%c0_32, %c0_33, %c0_34] : memref<8x1x32xf32, #tpu.memory_space<vmem>>, vector<8x1x32xf32>
      %c0_35 = arith.constant 0 : index
      %c0_36 = arith.constant 0 : index
      %c0_37 = arith.constant 0 : index
      %34 = vector.load %arg7[%c0_35, %c0_36, %c0_37] : memref<8x1x1xf32, #tpu.memory_space<vmem>>, vector<8x1x1xf32>
      %cst_38 = arith.constant 9.99999993E-9 : f32
      %35 = vector.broadcast %cst_38 : f32 to vector<8x1x1xf32>
      %36 = arith.addf %34, %35 : vector<8x1x1xf32>
      %37 = vector.broadcast %36 : vector<8x1x1xf32> to vector<8x1x32xf32>
      %38 = arith.divf %33, %37 : vector<8x1x32xf32>
      %c0_39 = arith.constant 0 : index
      %c0_40 = arith.constant 0 : index
      %c0_41 = arith.constant 0 : index
      %39 = vector.load %arg5[%c0_39, %c0_40, %c0_41] : memref<8x1x32xf32, #tpu.memory_space<vmem>>, vector<8x1x32xf32>
      tpu.vector_store %arg5[%c0_39, %c0_40, %c0_41], %38 {strides = array<i32>} : memref<8x1x32xf32, #tpu.memory_space<vmem>>, vector<8x1x32xf32>,
    } else {
    }
    return
  }
  func.func @transform_0(%arg0: i32, %arg1: i32) -> (i32, i32, i32) {
    %c0_i32 = arith.constant 0 : i32
    %c0_i32_0 = arith.constant 0 : i32
    %c0_i32_1 = arith.constant 0 : i32
    return %arg0, %c0_i32, %c0_i32_0 : i32, i32, i32
  }
  func.func @transform_1(%arg0: i32, %arg1: i32) -> (i32, i32, i32) {
    %c0_i32 = arith.constant 0 : i32
    %c0_i32_0 = arith.constant 0 : i32
    return %arg0, %arg1, %c0_i32 : i32, i32, i32
  }
  func.func @transform_2(%arg0: i32, %arg1: i32) -> (i32, i32, i32) {
    %c0_i32 = arith.constant 0 : i32
    %c0_i32_0 = arith.constant 0 : i32
    return %arg0, %arg1, %c0_i32 : i32, i32, i32
  }
  func.func @transform_3(%arg0: i32, %arg1: i32) -> (i32, i32, i32) {
    %c0_i32 = arith.constant 0 : i32
    %c0_i32_0 = arith.constant 0 : i32
    %c0_i32_1 = arith.constant 0 : i32
    return %arg0, %c0_i32, %c0_i32_0 : i32, i32, i32
  }
}

</mosaic_0001>

<llo_original>
// kernel: tpu_custom_call.1
$region0: #{tpu_custom_call.1}
  #allocation0 [shape = 'u32[]', space=smem, size = 0x4, offset = 0x4, fixed_abs, tag = 'smem constant byte address 0x4 - core index']
  #allocation1 [shape = 'u32[144,128]{1,0:T(1,128)}', space=vmem, size = 0x12000, scoped, tag = 'internal scratch']
  #allocation2 [shape = 'f32[8,1,32]{2,1,0:T(1,128)}', space=vmem, size = 0x1000, scoped, tag = 'scratch operand']
  #allocation3 [shape = 'f32[8,1,1]{2,1,0:T(1,128)}', space=vmem, size = 0x1000, scoped, tag = 'scratch operand']
  #allocation4 [shape = 'f32[8,1,1]{2,1,0:T(1,128)}', space=vmem, size = 0x1000, scoped, tag = 'scratch operand']
  %s0 = inlined_call_operand.hbm [shape: f32[8,1,32], index: 0, kind: input, shape index: {}]
  %s1 = inlined_call_operand.hbm [shape: f32[8,8,32], index: 1, kind: input, shape index: {}]
  %s2 = inlined_call_operand.hbm [shape: f32[8,8,32], index: 2, kind: input, shape index: {}]
  %s3 = inlined_call_operand.hbm [shape: f32[8,1,32], index: 3, kind: output, shape index: {}]
  %s4 = sld [smem:[#allocation0]]
  $region42: #{tpu_custom_call.1} parent=0
    _
  %s6 = ssub.s32 1, %s4
  %s7 = scalar_select 0, %s6, %s4
  $region1: #{tpu_custom_call.1} parent=0
    #allocation5 [shape = 'u8[4096]{0}', space=vmem, size = 0x1000, scoped, tag = 'input window, operand 0, single buffered']
    #allocation6 [shape = 's32[1]{0}', space=sflag, size = 0x4, scoped, tag = 'scoped memory for tpu_custom_call.1']
    #allocation7 [shape = 's32[1]{0}', space=sflag, size = 0x4, scoped, tag = 'scoped memory for tpu_custom_call.1']
    #allocation8 [shape = 'u8[32768]{0}', space=vmem, size = 0x8000, scoped, tag = 'input window, operand 1, single buffered']
    #allocation9 [shape = 's32[1]{0}', space=sflag, size = 0x4, scoped, tag = 'scoped memory for tpu_custom_call.1']
    #allocation10 [shape = 'u8[32768]{0}', space=vmem, size = 0x8000, scoped, tag = 'input window, operand 2, single buffered']
    #allocation11 [shape = 'u8[4096]{0}', space=vmem, size = 0x1000, scoped, tag = 'output window, operand 0, single buffered']
    %8 = vsyncpa [#allocation6], 0
    %9 = vsyncpa [#allocation9], 0
    %10 = vsyncpa [#allocation7], 0
    // Predicated region
    $region2: #{tpu_custom_call.1} parent=1 // pred_check
      _
    $region3: #{tpu_custom_call.1} parent=1 // pred_check_branch
      %12 = sbr.rel (0) target = $region5
    $region4: #{tpu_custom_call.1} parent=1 // pred_region
      %s14 = ssub.s32 128, 128
      %15 = vsyncadd [#allocation6], %s14
      %s16 = sshll.u32 [#allocation5], 4
      %s17 = int_to_ptr.vmem [resolvable:$true] %s16
      %22 = dma.hbm_to_vmem [thread:$0]  %s0, 128, %s17, [#allocation6], 16, 16, 1
    $region5: #{tpu_custom_call.1} parent=1 // pred_fallthru
      _
    // Predicated region
    $region6: #{tpu_custom_call.1} parent=1 // pred_check
      _
    $region7: #{tpu_custom_call.1} parent=1 // pred_check_branch
      %24 = sbr.rel (0) target = $region9
    $region8: #{tpu_custom_call.1} parent=1 // pred_region
      %s26 = ssub.s32 1024, 1024
      %27 = vsyncadd [#allocation9], %s26
      %s28 = sshll.u32 [#allocation8], 4
      %s29 = int_to_ptr.vmem [resolvable:$true] %s28
      %34 = dma.hbm_to_vmem [thread:$0]  %s1, 1024, %s29, [#allocation9], 128, 128, 8
    $region9: #{tpu_custom_call.1} parent=1 // pred_fallthru
      _
    // Predicated region
    $region10: #{tpu_custom_call.1} parent=1 // pred_check
      _
    $region11: #{tpu_custom_call.1} parent=1 // pred_check_branch
      %36 = sbr.rel (0) target = $region13
    $region12: #{tpu_custom_call.1} parent=1 // pred_region
      %s38 = ssub.s32 1024, 1024
      %39 = vsyncadd [#allocation9], %s38
      %s40 = sshll.u32 [#allocation10], 4
      %s41 = int_to_ptr.vmem [resolvable:$true] %s40
      %46 = dma.hbm_to_vmem [thread:$0]  %s2, 1024, %s41, [#allocation9], 128, 128, 8
    $region13: #{tpu_custom_call.1} parent=1 // pred_fallthru
      _
    // Predicated region
    $region14: #{tpu_custom_call.1} parent=1 // pred_check
      _
    $region15: #{tpu_custom_call.1} parent=1 // pred_check_branch
      %48 = sbr.rel (0) target = $region17
    $region16: #{tpu_custom_call.1} parent=1 // pred_region
      %49 = dma.done [#allocation6], 128
    $region17: #{tpu_custom_call.1} parent=1 // pred_fallthru
      _
    // Predicated region
    $region18: #{tpu_custom_call.1} parent=1 // pred_check
      _
    $region19: #{tpu_custom_call.1} parent=1 // pred_check_branch
      %51 = sbr.rel (0) target = $region21
    $region20: #{tpu_custom_call.1} parent=1 // pred_region
      %52 = dma.done [#allocation9], 1024
    $region21: #{tpu_custom_call.1} parent=1 // pred_fallthru
      _
    // Predicated region
    $region22: #{tpu_custom_call.1} parent=1 // pred_check
      _
    $region23: #{tpu_custom_call.1} parent=1 // pred_check_branch
      %54 = sbr.rel (0) target = $region25
    $region24: #{tpu_custom_call.1} parent=1 // pred_region
      %55 = dma.done [#allocation9], 1024
    $region25: #{tpu_custom_call.1} parent=1 // pred_fallthru
      _
    %p56 = scmp.eq.s32.totalorder 0, 0
    // Predicated region
    $region26: #{tpu_custom_call.1} parent=1 // pred_check
      %p57 = pneg %p56
    $region27: #{tpu_custom_call.1} parent=1 // pred_check_branch
      %59 = sbr.rel (%p57) target = $region29
    $region28: #{tpu_custom_call.1} parent=1 // pred_region
      %vm60 = vcmask 253952
      %61 = vst.msk [vmem:[#allocation2] sm:$0x1] %vm60, 0.0
      %62 = vst.msk [vmem:[#allocation2 + $0x1] sm:$0x1] %vm60, 0.0
      %63 = vst.msk [vmem:[#allocation2 + $0x2] sm:$0x1] %vm60, 0.0
      %64 = vst.msk [vmem:[#allocation2 + $0x3] sm:$0x1] %vm60, 0.0
      %65 = vst.msk [vmem:[#allocation2 + $0x4] sm:$0x1] %vm60, 0.0
      %66 = vst.msk [vmem:[#allocation2 + $0x5] sm:$0x1] %vm60, 0.0
      %67 = vst.msk [vmem:[#allocation2 + $0x6] sm:$0x1] %vm60, 0.0
      %68 = vst.msk [vmem:[#allocation2 + $0x7] sm:$0x1] %vm60, 0.0
      %vm69 = vcmask 0
      %70 = vst.msk [vmem:[#allocation3] sm:$0x1] %vm69, 0.0
      %71 = vst.msk [vmem:[#allocation3 + $0x1] sm:$0x1] %vm69, 0.0
      %72 = vst.msk [vmem:[#allocation3 + $0x2] sm:$0x1] %vm69, 0.0
      %73 = vst.msk [vmem:[#allocation3 + $0x3] sm:$0x1] %vm69, 0.0
      %74 = vst.msk [vmem:[#allocation3 + $0x4] sm:$0x1] %vm69, 0.0
      %75 = vst.msk [vmem:[#allocation3 + $0x5] sm:$0x1] %vm69, 0.0
      %76 = vst.msk [vmem:[#allocation3 + $0x6] sm:$0x1] %vm69, 0.0
      %77 = vst.msk [vmem:[#allocation3 + $0x7] sm:$0x1] %vm69, 0.0
      %v78 = vld [vmem:[#allocation5] sm:$0x1]
      %v79 = vld [vmem:[#allocation5 + $0x1] sm:$0x1]
      %v80 = vld [vmem:[#allocation5 + $0x2] sm:$0x1]
      %v81 = vld [vmem:[#allocation5 + $0x3] sm:$0x1]
      %v82 = vld [vmem:[#allocation5 + $0x4] sm:$0x1]
      %v83 = vld [vmem:[#allocation5 + $0x5] sm:$0x1]
      %v84 = vld [vmem:[#allocation5 + $0x6] sm:$0x1]
      %v85 = vld [vmem:[#allocation5 + $0x7] sm:$0x1]
      %v86 = vmul.f32 %v78, %v78
      %v87 = vmul.f32 %v79, %v79
      %v88 = vmul.f32 %v80, %v80
      %v89 = vmul.f32 %v81, %v81
      %v90 = vmul.f32 %v82, %v82
      %v91 = vmul.f32 %v83, %v83
      %v92 = vmul.f32 %v84, %v84
      %v93 = vmul.f32 %v85, %v85
      %v94 = vsel %vm60, %v86, 0.0
      %95 = vadd.xlane.f32.xlu0 %v94
      %v96 = vpop.xlane.xlu0 %95
      %v97 = vsel %vm60, %v87, 0.0
      %98 = vadd.xlane.f32.xlu0 %v97
      %v99 = vpop.xlane.xlu0 %98
      %v100 = vsel %vm60, %v88, 0.0
      %101 = vadd.xlane.f32.xlu0 %v100
      %v102 = vpop.xlane.xlu0 %101
      %v103 = vsel %vm60, %v89, 0.0
      %104 = vadd.xlane.f32.xlu0 %v103
      %v105 = vpop.xlane.xlu0 %104
      %v106 = vsel %vm60, %v90, 0.0
      %107 = vadd.xlane.f32.xlu0 %v106
      %v108 = vpop.xlane.xlu0 %107
      %v109 = vsel %vm60, %v91, 0.0
      %110 = vadd.xlane.f32.xlu0 %v109
      %v111 = vpop.xlane.xlu0 %110
      %v112 = vsel %vm60, %v92, 0.0
      %113 = vadd.xlane.f32.xlu0 %v112
      %v114 = vpop.xlane.xlu0 %113
      %v115 = vsel %vm60, %v93, 0.0
      %116 = vadd.xlane.f32.xlu0 %v115
      %v117 = vpop.xlane.xlu0 %116
      %118 = vst.msk [vmem:[#allocation4] sm:$0x1] %vm69, %v96
      %119 = vst.msk [vmem:[#allocation4 + $0x1] sm:$0x1] %vm69, %v99
      %120 = vst.msk [vmem:[#allocation4 + $0x2] sm:$0x1] %vm69, %v102
      %121 = vst.msk [vmem:[#allocation4 + $0x3] sm:$0x1] %vm69, %v105
      %122 = vst.msk [vmem:[#allocation4 + $0x4] sm:$0x1] %vm69, %v108
      %123 = vst.msk [vmem:[#allocation4 + $0x5] sm:$0x1] %vm69, %v111
      %124 = vst.msk [vmem:[#allocation4 + $0x6] sm:$0x1] %vm69, %v114
      %125 = vst.msk [vmem:[#allocation4 + $0x7] sm:$0x1] %vm69, %v117
    $region29: #{tpu_custom_call.1} parent=1 // pred_fallthru
      _
    %v126 = vld [vmem:[#allocation8] sm:$0xff]
    %v127 = vld [vmem:[#allocation8 + $0x8] sm:$0xff]
    %v128 = vld [vmem:[#allocation8 + $0x10] sm:$0xff]
    %v129 = vld [vmem:[#allocation8 + $0x18] sm:$0xff]
    %v130 = vld [vmem:[#allocation8 + $0x20] sm:$0xff]
    %v131 = vld [vmem:[#allocation8 + $0x28] sm:$0xff]
    %v132 = vld [vmem:[#allocation8 + $0x30] sm:$0xff]
    %v133 = vld [vmem:[#allocation8 + $0x38] sm:$0xff]
    %v134 = vmul.f32 %v126, %v126
    %v135 = vmul.f32 %v127, %v127
    %v136 = vmul.f32 %v128, %v128
    %v137 = vmul.f32 %v129, %v129
    %v138 = vmul.f32 %v130, %v130
    %v139 = vmul.f32 %v131, %v131
    %v140 = vmul.f32 %v132, %v132
    %v141 = vmul.f32 %v133, %v133
    %vm142 = vcmask 261120
    %v143 = vsel %vm142, %v134, 0.0
    %144 = vadd.xlane.f32.xlu0 %v143
    %v145 = vpop.xlane.xlu0 %144
    %v146 = vsel %vm142, %v135, 0.0
    %147 = vadd.xlane.f32.xlu0 %v146
    %v148 = vpop.xlane.xlu0 %147
    %v149 = vsel %vm142, %v136, 0.0
    %150 = vadd.xlane.f32.xlu0 %v149
    %v151 = vpop.xlane.xlu0 %150
    %v152 = vsel %vm142, %v137, 0.0
    %153 = vadd.xlane.f32.xlu0 %v152
    %v154 = vpop.xlane.xlu0 %153
    %v155 = vsel %vm142, %v138, 0.0
    %156 = vadd.xlane.f32.xlu0 %v155
    %v157 = vpop.xlane.xlu0 %156
    %v158 = vsel %vm142, %v139, 0.0
    %159 = vadd.xlane.f32.xlu0 %v158
    %v160 = vpop.xlane.xlu0 %159
    %v161 = vsel %vm142, %v140, 0.0
    %162 = vadd.xlane.f32.xlu0 %v161
    %v163 = vpop.xlane.xlu0 %162
    %v164 = vsel %vm142, %v141, 0.0
    %165 = vadd.xlane.f32.xlu0 %v164
    %v166 = vpop.xlane.xlu0 %165
    %v167 = vld [vmem:[#allocation5] sm:$0x1]
    %v168 = vld [vmem:[#allocation5 + $0x1] sm:$0x1]
    %v169 = vld [vmem:[#allocation5 + $0x2] sm:$0x1]
    %v170 = vld [vmem:[#allocation5 + $0x3] sm:$0x1]
    %v171 = vld [vmem:[#allocation5 + $0x4] sm:$0x1]
    %v172 = vld [vmem:[#allocation5 + $0x5] sm:$0x1]
    %v173 = vld [vmem:[#allocation5 + $0x6] sm:$0x1]
    %v174 = vld [vmem:[#allocation5 + $0x7] sm:$0x1]
    %v176 = vsel %vm142, %v167, 0
    %v179 = vsel %vm142, %v126, 0
    %181 = vmatprep.subr.mxu0 0.0
    %182 = vmatpush1.xpose.msra.mxu0 %v179
    %183 = vmatprep.subr.mxu0 0.0
    %184 = vmatpush1.xpose.msra.mxu0 0.0
    %185 = vmatprep.subr.mxu0 0.0
    %186 = vmatpush1.xpose.msra.mxu0 0.0
    %187 = vmatprep.subr.mxu0 0.0
    %188 = vmatpush1.xpose.msra.mxu0 0.0
    %189 = vmatprep.subr.mxu0 0.0
    %190 = vmatpush1.xpose.msra.mxu0 0.0
    %191 = vmatprep.subr.mxu0 0.0
    %192 = vmatpush1.xpose.msra.mxu0 0.0
    %193 = vmatprep.subr.mxu0 0.0
    %194 = vmatpush1.xpose.msra.mxu0 0.0
    %195 = vmatprep.subr.mxu0 0.0
    %196 = vmatpush1.xpose.msra.mxu0 0.0
    %197 = vmatprep.subr.mxu0 0.0
    %198 = vmatpush1.xpose.msra.mxu0 0.0
    %199 = vmatprep.subr.mxu0 0.0
    %200 = vmatpush1.xpose.msra.mxu0 0.0
    %201 = vmatprep.subr.mxu0 0.0
    %202 = vmatpush1.xpose.msra.mxu0 0.0
    %203 = vmatprep.subr.mxu0 0.0
    %204 = vmatpush1.xpose.msra.mxu0 0.0
    %205 = vmatprep.subr.mxu0 0.0
    %206 = vmatpush1.xpose.msra.mxu0 0.0
    %207 = vmatprep.subr.mxu0 0.0
    %208 = vmatpush1.xpose.msra.mxu0 0.0
    %209 = vmatprep.subr.mxu0 0.0
    %210 = vmatpush1.xpose.msra.mxu0 0.0
    %211 = vmatprep.subr.mxu0 0.0
    %212 = vmatpush1.xpose.msra.mxu0 0.0
    %213 = vmatprep.subr.mxu0 0.0
    %214 = vmatpush1.xpose.msra.mxu0 0.0
    %215 = vmatprep.subr.mxu0 0.0
    %216 = vmatpush1.xpose.msra.mxu0 0.0
    %217 = vmatprep.subr.mxu0 0.0
    %218 = vmatpush1.xpose.msra.mxu0 0.0
    %219 = vmatprep.subr.mxu0 0.0
    %220 = vmatpush1.xpose.msra.mxu0 0.0
    %221 = vmatprep.subr.mxu0 0.0
    %222 = vmatpush1.xpose.msra.mxu0 0.0
    %223 = vmatprep.subr.mxu0 0.0
    %224 = vmatpush1.xpose.msra.mxu0 0.0
    %225 = vmatprep.subr.mxu0 0.0
    %226 = vmatpush1.xpose.msra.mxu0 0.0
    %227 = vmatprep.subr.mxu0 0.0
    %228 = vmatpush1.xpose.msra.mxu0 0.0
    %229 = vmatprep.subr.mxu0 0.0
    %230 = vmatpush1.xpose.msra.mxu0 0.0
    %231 = vmatprep.subr.mxu0 0.0
    %232 = vmatpush1.xpose.msra.mxu0 0.0
    %233 = vmatprep.subr.mxu0 0.0
    %234 = vmatpush1.xpose.msra.mxu0 0.0
    %235 = vmatprep.subr.mxu0 0.0
    %236 = vmatpush1.xpose.msra.mxu0 0.0
    %237 = vmatprep.subr.mxu0 0.0
    %238 = vmatpush1.xpose.msra.mxu0 0.0
    %239 = vmatprep.subr.mxu0 0.0
    %240 = vmatpush1.xpose.msra.mxu0 0.0
    %241 = vmatprep.subr.mxu0 0.0
    %242 = vmatpush1.xpose.msra.mxu0 0.0
    %243 = vmatprep.subr.mxu0 0.0
    %244 = vmatpush1.xpose.msra.mxu0 0.0
    %245 = vmatprep.mubr.f32.mxu0 0.0
    %246 = vmatmul.mubr.f32.gmra.mrb[0].mxu0 %v176
    %v247 = vpop.f32.mrb[0].mxu0
    %v248 = vadd.f32 0.0, %v247
    %v249 = vpop.f32.mrb[0].mxu0
    %250 = vdwg.mxu0
    %v252 = vsel %vm142, %v168, 0
    %v255 = vsel %vm142, %v127, 0
    %257 = vmatprep.subr.mxu0 0.0
    %258 = vmatpush1.xpose.msra.mxu0 %v255
    %259 = vmatprep.subr.mxu0 0.0
    %260 = vmatpush1.xpose.msra.mxu0 0.0
    %261 = vmatprep.subr.mxu0 0.0
    %262 = vmatpush1.xpose.msra.mxu0 0.0
    %263 = vmatprep.subr.mxu0 0.0
    %264 = vmatpush1.xpose.msra.mxu0 0.0
    %265 = vmatprep.subr.mxu0 0.0
    %266 = vmatpush1.xpose.msra.mxu0 0.0
    %267 = vmatprep.subr.mxu0 0.0
    %268 = vmatpush1.xpose.msra.mxu0 0.0
    %269 = vmatprep.subr.mxu0 0.0
    %270 = vmatpush1.xpose.msra.mxu0 0.0
    %271 = vmatprep.subr.mxu0 0.0
    %272 = vmatpush1.xpose.msra.mxu0 0.0
    %273 = vmatprep.subr.mxu0 0.0
    %274 = vmatpush1.xpose.msra.mxu0 0.0
    %275 = vmatprep.subr.mxu0 0.0
    %276 = vmatpush1.xpose.msra.mxu0 0.0
    %277 = vmatprep.subr.mxu0 0.0
    %278 = vmatpush1.xpose.msra.mxu0 0.0
    %279 = vmatprep.subr.mxu0 0.0
    %280 = vmatpush1.xpose.msra.mxu0 0.0
    %281 = vmatprep.subr.mxu0 0.0
    %282 = vmatpush1.xpose.msra.mxu0 0.0
    %283 = vmatprep.subr.mxu0 0.0
    %284 = vmatpush1.xpose.msra.mxu0 0.0
    %285 = vmatprep.subr.mxu0 0.0
    %286 = vmatpush1.xpose.msra.mxu0 0.0
    %287 = vmatprep.subr.mxu0 0.0
    %288 = vmatpush1.xpose.msra.mxu0 0.0
    %289 = vmatprep.subr.mxu0 0.0
    %290 = vmatpush1.xpose.msra.mxu0 0.0
    %291 = vmatprep.subr.mxu0 0.0
    %292 = vmatpush1.xpose.msra.mxu0 0.0
    %293 = vmatprep.subr.mxu0 0.0
    %294 = vmatpush1.xpose.msra.mxu0 0.0
    %295 = vmatprep.subr.mxu0 0.0
    %296 = vmatpush1.xpose.msra.mxu0 0.0
    %297 = vmatprep.subr.mxu0 0.0
    %298 = vmatpush1.xpose.msra.mxu0 0.0
    %299 = vmatprep.subr.mxu0 0.0
    %300 = vmatpush1.xpose.msra.mxu0 0.0
    %301 = vmatprep.subr.mxu0 0.0
    %302 = vmatpush1.xpose.msra.mxu0 0.0
    %303 = vmatprep.subr.mxu0 0.0
    %304 = vmatpush1.xpose.msra.mxu0 0.0
    %305 = vmatprep.subr.mxu0 0.0
    %306 = vmatpush1.xpose.msra.mxu0 0.0
    %307 = vmatprep.subr.mxu0 0.0
    %308 = vmatpush1.xpose.msra.mxu0 0.0
    %309 = vmatprep.subr.mxu0 0.0
    %310 = vmatpush1.xpose.msra.mxu0 0.0
    %311 = vmatprep.subr.mxu0 0.0
    %312 = vmatpush1.xpose.msra.mxu0 0.0
    %313 = vmatprep.subr.mxu0 0.0
    %314 = vmatpush1.xpose.msra.mxu0 0.0
    %315 = vmatprep.subr.mxu0 0.0
    %316 = vmatpush1.xpose.msra.mxu0 0.0
    %317 = vmatprep.subr.mxu0 0.0
    %318 = vmatpush1.xpose.msra.mxu0 0.0
    %319 = vmatprep.subr.mxu0 0.0
    %320 = vmatpush1.xpose.msra.mxu0 0.0
    %321 = vmatprep.mubr.f32.mxu0 0.0
    %322 = vmatmul.mubr.f32.gmra.mrb[0].mxu0 %v252
    %v323 = vpop.f32.mrb[0].mxu0
    %v324 = vadd.f32 0.0, %v323
    %v325 = vpop.f32.mrb[0].mxu0
    %326 = vdwg.mxu0
    %v328 = vsel %vm142, %v169, 0
    %v331 = vsel %vm142, %v128, 0
    %333 = vmatprep.subr.mxu0 0.0
    %334 = vmatpush1.xpose.msra.mxu0 %v331
    %335 = vmatprep.subr.mxu0 0.0
    %336 = vmatpush1.xpose.msra.mxu0 0.0
    %337 = vmatprep.subr.mxu0 0.0
    %338 = vmatpush1.xpose.msra.mxu0 0.0
    %339 = vmatprep.subr.mxu0 0.0
    %340 = vmatpush1.xpose.msra.mxu0 0.0
    %341 = vmatprep.subr.mxu0 0.0
    %342 = vmatpush1.xpose.msra.mxu0 0.0
    %343 = vmatprep.subr.mxu0 0.0
    %344 = vmatpush1.xpose.msra.mxu0 0.0
    %345 = vmatprep.subr.mxu0 0.0
    %346 = vmatpush1.xpose.msra.mxu0 0.0
    %347 = vmatprep.subr.mxu0 0.0
    %348 = vmatpush1.xpose.msra.mxu0 0.0
    %349 = vmatprep.subr.mxu0 0.0
    %350 = vmatpush1.xpose.msra.mxu0 0.0
    %351 = vmatprep.subr.mxu0 0.0
    %352 = vmatpush1.xpose.msra.mxu0 0.0
    %353 = vmatprep.subr.mxu0 0.0
    %354 = vmatpush1.xpose.msra.mxu0 0.0
    %355 = vmatprep.subr.mxu0 0.0
    %356 = vmatpush1.xpose.msra.mxu0 0.0
    %357 = vmatprep.subr.mxu0 0.0
    %358 = vmatpush1.xpose.msra.mxu0 0.0
    %359 = vmatprep.subr.mxu0 0.0
    %360 = vmatpush1.xpose.msra.mxu0 0.0
    %361 = vmatprep.subr.mxu0 0.0
    %362 = vmatpush1.xpose.msra.mxu0 0.0
    %363 = vmatprep.subr.mxu0 0.0
    %364 = vmatpush1.xpose.msra.mxu0 0.0
    %365 = vmatprep.subr.mxu0 0.0
    %366 = vmatpush1.xpose.msra.mxu0 0.0
    %367 = vmatprep.subr.mxu0 0.0
    %368 = vmatpush1.xpose.msra.mxu0 0.0
    %369 = vmatprep.subr.mxu0 0.0
    %370 = vmatpush1.xpose.msra.mxu0 0.0
    %371 = vmatprep.subr.mxu0 0.0
    %372 = vmatpush1.xpose.msra.mxu0 0.0
    %373 = vmatprep.subr.mxu0 0.0
    %374 = vmatpush1.xpose.msra.mxu0 0.0
    %375 = vmatprep.subr.mxu0 0.0
    %376 = vmatpush1.xpose.msra.mxu0 0.0
    %377 = vmatprep.subr.mxu0 0.0
    %378 = vmatpush1.xpose.msra.mxu0 0.0
    %379 = vmatprep.subr.mxu0 0.0
    %380 = vmatpush1.xpose.msra.mxu0 0.0
    %381 = vmatprep.subr.mxu0 0.0
    %382 = vmatpush1.xpose.msra.mxu0 0.0
    %383 = vmatprep.subr.mxu0 0.0
    %384 = vmatpush1.xpose.msra.mxu0 0.0
    %385 = vmatprep.subr.mxu0 0.0
    %386 = vmatpush1.xpose.msra.mxu0 0.0
    %387 = vmatprep.subr.mxu0 0.0
    %388 = vmatpush1.xpose.msra.mxu0 0.0
    %389 = vmatprep.subr.mxu0 0.0
    %390 = vmatpush1.xpose.msra.mxu0 0.0
    %391 = vmatprep.subr.mxu0 0.0
    %392 = vmatpush1.xpose.msra.mxu0 0.0
    %393 = vmatprep.subr.mxu0 0.0
    %394 = vmatpush1.xpose.msra.mxu0 0.0
    %395 = vmatprep.subr.mxu0 0.0
    %396 = vmatpush1.xpose.msra.mxu0 0.0
    %397 = vmatprep.mubr.f32.mxu0 0.0
    %398 = vmatmul.mubr.f32.gmra.mrb[0].mxu0 %v328
    %v399 = vpop.f32.mrb[0].mxu0
    %v400 = vadd.f32 0.0, %v399
    %v401 = vpop.f32.mrb[0].mxu0
    %402 = vdwg.mxu0
    %v404 = vsel %vm142, %v170, 0
    %v407 = vsel %vm142, %v129, 0
    %409 = vmatprep.subr.mxu0 0.0
    %410 = vmatpush1.xpose.msra.mxu0 %v407
    %411 = vmatprep.subr.mxu0 0.0
    %412 = vmatpush1.xpose.msra.mxu0 0.0
    %413 = vmatprep.subr.mxu0 0.0
    %414 = vmatpush1.xpose.msra.mxu0 0.0
    %415 = vmatprep.subr.mxu0 0.0
    %416 = vmatpush1.xpose.msra.mxu0 0.0
    %417 = vmatprep.subr.mxu0 0.0
    %418 = vmatpush1.xpose.msra.mxu0 0.0
    %419 = vmatprep.subr.mxu0 0.0
    %420 = vmatpush1.xpose.msra.mxu0 0.0
    %421 = vmatprep.subr.mxu0 0.0
    %422 = vmatpush1.xpose.msra.mxu0 0.0
    %423 = vmatprep.subr.mxu0 0.0
    %424 = vmatpush1.xpose.msra.mxu0 0.0
    %425 = vmatprep.subr.mxu0 0.0
    %426 = vmatpush1.xpose.msra.mxu0 0.0
    %427 = vmatprep.subr.mxu0 0.0
    %428 = vmatpush1.xpose.msra.mxu0 0.0
    %429 = vmatprep.subr.mxu0 0.0
    %430 = vmatpush1.xpose.msra.mxu0 0.0
    %431 = vmatprep.subr.mxu0 0.0
    %432 = vmatpush1.xpose.msra.mxu0 0.0
    %433 = vmatprep.subr.mxu0 0.0
    %434 = vmatpush1.xpose.msra.mxu0 0.0
    %435 = vmatprep.subr.mxu0 0.0
    %436 = vmatpush1.xpose.msra.mxu0 0.0
    %437 = vmatprep.subr.mxu0 0.0
    %438 = vmatpush1.xpose.msra.mxu0 0.0
    %439 = vmatprep.subr.mxu0 0.0
    %440 = vmatpush1.xpose.msra.mxu0 0.0
    %441 = vmatprep.subr.mxu0 0.0
    %442 = vmatpush1.xpose.msra.mxu0 0.0
    %443 = vmatprep.subr.mxu0 0.0
    %444 = vmatpush1.xpose.msra.mxu0 0.0
    %445 = vmatprep.subr.mxu0 0.0
    %446 = vmatpush1.xpose.msra.mxu0 0.0
    %447 = vmatprep.subr.mxu0 0.0
    %448 = vmatpush1.xpose.msra.mxu0 0.0
    %449 = vmatprep.subr.mxu0 0.0
    %450 = vmatpush1.xpose.msra.mxu0 0.0
    %451 = vmatprep.subr.mxu0 0.0
    %452 = vmatpush1.xpose.msra.mxu0 0.0
    %453 = vmatprep.subr.mxu0 0.0
    %454 = vmatpush1.xpose.msra.mxu0 0.0
    %455 = vmatprep.subr.mxu0 0.0
    %456 = vmatpush1.xpose.msra.mxu0 0.0
    %457 = vmatprep.subr.mxu0 0.0
    %458 = vmatpush1.xpose.msra.mxu0 0.0
    %459 = vmatprep.subr.mxu0 0.0
    %460 = vmatpush1.xpose.msra.mxu0 0.0
    %461 = vmatprep.subr.mxu0 0.0
    %462 = vmatpush1.xpose.msra.mxu0 0.0
    %463 = vmatprep.subr.mxu0 0.0
    %464 = vmatpush1.xpose.msra.mxu0 0.0
    %465 = vmatprep.subr.mxu0 0.0
    %466 = vmatpush1.xpose.msra.mxu0 0.0
    %467 = vmatprep.subr.mxu0 0.0
    %468 = vmatpush1.xpose.msra.mxu0 0.0
    %469 = vmatprep.subr.mxu0 0.0
    %470 = vmatpush1.xpose.msra.mxu0 0.0
    %471 = vmatprep.subr.mxu0 0.0
    %472 = vmatpush1.xpose.msra.mxu0 0.0
    %473 = vmatprep.mubr.f32.mxu0 0.0
    %474 = vmatmul.mubr.f32.gmra.mrb[0].mxu0 %v404
    %v475 = vpop.f32.mrb[0].mxu0
    %v476 = vadd.f32 0.0, %v475
    %v477 = vpop.f32.mrb[0].mxu0
    %478 = vdwg.mxu0
    %v480 = vsel %vm142, %v171, 0
    %v483 = vsel %vm142, %v130, 0
    %485 = vmatprep.subr.mxu0 0.0
    %486 = vmatpush1.xpose.msra.mxu0 %v483
    %487 = vmatprep.subr.mxu0 0.0
    %488 = vmatpush1.xpose.msra.mxu0 0.0
    %489 = vmatprep.subr.mxu0 0.0
    %490 = vmatpush1.xpose.msra.mxu0 0.0
    %491 = vmatprep.subr.mxu0 0.0
    %492 = vmatpush1.xpose.msra.mxu0 0.0
    %493 = vmatprep.subr.mxu0 0.0
    %494 = vmatpush1.xpose.msra.mxu0 0.0
    %495 = vmatprep.subr.mxu0 0.0
    %496 = vmatpush1.xpose.msra.mxu0 0.0
    %497 = vmatprep.subr.mxu0 0.0
    %498 = vmatpush1.xpose.msra.mxu0 0.0
    %499 = vmatprep.subr.mxu0 0.0
    %500 = vmatpush1.xpose.msra.mxu0 0.0
    %501 = vmatprep.subr.mxu0 0.0
    %502 = vmatpush1.xpose.msra.mxu0 0.0
    %503 = vmatprep.subr.mxu0 0.0
    %504 = vmatpush1.xpose.msra.mxu0 0.0
    %505 = vmatprep.subr.mxu0 0.0
    %506 = vmatpush1.xpose.msra.mxu0 0.0
    %507 = vmatprep.subr.mxu0 0.0
    %508 = vmatpush1.xpose.msra.mxu0 0.0
    %509 = vmatprep.subr.mxu0 0.0
    %510 = vmatpush1.xpose.msra.mxu0 0.0
    %511 = vmatprep.subr.mxu0 0.0
    %512 = vmatpush1.xpose.msra.mxu0 0.0
    %513 = vmatprep.subr.mxu0 0.0
    %514 = vmatpush1.xpose.msra.mxu0 0.0
    %515 = vmatprep.subr.mxu0 0.0
    %516 = vmatpush1.xpose.msra.mxu0 0.0
    %517 = vmatprep.subr.mxu0 0.0
    %518 = vmatpush1.xpose.msra.mxu0 0.0
    %519 = vmatprep.subr.mxu0 0.0
    %520 = vmatpush1.xpose.msra.mxu0 0.0
    %521 = vmatprep.subr.mxu0 0.0
    %522 = vmatpush1.xpose.msra.mxu0 0.0
    %523 = vmatprep.subr.mxu0 0.0
    %524 = vmatpush1.xpose.msra.mxu0 0.0
    %525 = vmatprep.subr.mxu0 0.0
    %526 = vmatpush1.xpose.msra.mxu0 0.0
    %527 = vmatprep.subr.mxu0 0.0
    %528 = vmatpush1.xpose.msra.mxu0 0.0
    %529 = vmatprep.subr.mxu0 0.0
    %530 = vmatpush1.xpose.msra.mxu0 0.0
    %531 = vmatprep.subr.mxu0 0.0
    %532 = vmatpush1.xpose.msra.mxu0 0.0
    %533 = vmatprep.subr.mxu0 0.0
    %534 = vmatpush1.xpose.msra.mxu0 0.0
    %535 = vmatprep.subr.mxu0 0.0
    %536 = vmatpush1.xpose.msra.mxu0 0.0
    %537 = vmatprep.subr.mxu0 0.0
    %538 = vmatpush1.xpose.msra.mxu0 0.0
    %539 = vmatprep.subr.mxu0 0.0
    %540 = vmatpush1.xpose.msra.mxu0 0.0
    %541 = vmatprep.subr.mxu0 0.0
    %542 = vmatpush1.xpose.msra.mxu0 0.0
    %543 = vmatprep.subr.mxu0 0.0
    %544 = vmatpush1.xpose.msra.mxu0 0.0
    %545 = vmatprep.subr.mxu0 0.0
    %546 = vmatpush1.xpose.msra.mxu0 0.0
    %547 = vmatprep.subr.mxu0 0.0
    %548 = vmatpush1.xpose.msra.mxu0 0.0
    %549 = vmatprep.mubr.f32.mxu0 0.0
    %550 = vmatmul.mubr.f32.gmra.mrb[0].mxu0 %v480
    %v551 = vpop.f32.mrb[0].mxu0
    %v552 = vadd.f32 0.0, %v551
    %v553 = vpop.f32.mrb[0].mxu0
    %554 = vdwg.mxu0
    %v556 = vsel %vm142, %v172, 0
    %v559 = vsel %vm142, %v131, 0
    %561 = vmatprep.subr.mxu0 0.0
    %562 = vmatpush1.xpose.msra.mxu0 %v559
    %563 = vmatprep.subr.mxu0 0.0
    %564 = vmatpush1.xpose.msra.mxu0 0.0
    %565 = vmatprep.subr.mxu0 0.0
    %566 = vmatpush1.xpose.msra.mxu0 0.0
    %567 = vmatprep.subr.mxu0 0.0
    %568 = vmatpush1.xpose.msra.mxu0 0.0
    %569 = vmatprep.subr.mxu0 0.0
    %570 = vmatpush1.xpose.msra.mxu0 0.0
    %571 = vmatprep.subr.mxu0 0.0
    %572 = vmatpush1.xpose.msra.mxu0 0.0
    %573 = vmatprep.subr.mxu0 0.0
    %574 = vmatpush1.xpose.msra.mxu0 0.0
    %575 = vmatprep.subr.mxu0 0.0
    %576 = vmatpush1.xpose.msra.mxu0 0.0
    %577 = vmatprep.subr.mxu0 0.0
    %578 = vmatpush1.xpose.msra.mxu0 0.0
    %579 = vmatprep.subr.mxu0 0.0
    %580 = vmatpush1.xpose.msra.mxu0 0.0
    %581 = vmatprep.subr.mxu0 0.0
    %582 = vmatpush1.xpose.msra.mxu0 0.0
    %583 = vmatprep.subr.mxu0 0.0
    %584 = vmatpush1.xpose.msra.mxu0 0.0
    %585 = vmatprep.subr.mxu0 0.0
    %586 = vmatpush1.xpose.msra.mxu0 0.0
    %587 = vmatprep.subr.mxu0 0.0
    %588 = vmatpush1.xpose.msra.mxu0 0.0
    %589 = vmatprep.subr.mxu0 0.0
    %590 = vmatpush1.xpose.msra.mxu0 0.0
    %591 = vmatprep.subr.mxu0 0.0
    %592 = vmatpush1.xpose.msra.mxu0 0.0
    %593 = vmatprep.subr.mxu0 0.0
    %594 = vmatpush1.xpose.msra.mxu0 0.0
    %595 = vmatprep.subr.mxu0 0.0
    %596 = vmatpush1.xpose.msra.mxu0 0.0
    %597 = vmatprep.subr.mxu0 0.0
    %598 = vmatpush1.xpose.msra.mxu0 0.0
    %599 = vmatprep.subr.mxu0 0.0
    %600 = vmatpush1.xpose.msra.mxu0 0.0
    %601 = vmatprep.subr.mxu0 0.0
    %602 = vmatpush1.xpose.msra.mxu0 0.0
    %603 = vmatprep.subr.mxu0 0.0
    %604 = vmatpush1.xpose.msra.mxu0 0.0
    %605 = vmatprep.subr.mxu0 0.0
    %606 = vmatpush1.xpose.msra.mxu0 0.0
    %607 = vmatprep.subr.mxu0 0.0
    %608 = vmatpush1.xpose.msra.mxu0 0.0
    %609 = vmatprep.subr.mxu0 0.0
    %610 = vmatpush1.xpose.msra.mxu0 0.0
    %611 = vmatprep.subr.mxu0 0.0
    %612 = vmatpush1.xpose.msra.mxu0 0.0
    %613 = vmatprep.subr.mxu0 0.0
    %614 = vmatpush1.xpose.msra.mxu0 0.0
    %615 = vmatprep.subr.mxu0 0.0
    %616 = vmatpush1.xpose.msra.mxu0 0.0
    %617 = vmatprep.subr.mxu0 0.0
    %618 = vmatpush1.xpose.msra.mxu0 0.0
    %619 = vmatprep.subr.mxu0 0.0
    %620 = vmatpush1.xpose.msra.mxu0 0.0
    %621 = vmatprep.subr.mxu0 0.0
    %622 = vmatpush1.xpose.msra.mxu0 0.0
    %623 = vmatprep.subr.mxu0 0.0
    %624 = vmatpush1.xpose.msra.mxu0 0.0
    %625 = vmatprep.mubr.f32.mxu0 0.0
    %626 = vmatmul.mubr.f32.gmra.mrb[0].mxu0 %v556
    %v627 = vpop.f32.mrb[0].mxu0
    %v628 = vadd.f32 0.0, %v627
    %v629 = vpop.f32.mrb[0].mxu0
    %630 = vdwg.mxu0
    %v632 = vsel %vm142, %v173, 0
    %v635 = vsel %vm142, %v132, 0
    %637 = vmatprep.subr.mxu0 0.0
    %638 = vmatpush1.xpose.msra.mxu0 %v635
    %639 = vmatprep.subr.mxu0 0.0
    %640 = vmatpush1.xpose.msra.mxu0 0.0
    %641 = vmatprep.subr.mxu0 0.0
    %642 = vmatpush1.xpose.msra.mxu0 0.0
    %643 = vmatprep.subr.mxu0 0.0
    %644 = vmatpush1.xpose.msra.mxu0 0.0
    %645 = vmatprep.subr.mxu0 0.0
    %646 = vmatpush1.xpose.msra.mxu0 0.0
    %647 = vmatprep.subr.mxu0 0.0
    %648 = vmatpush1.xpose.msra.mxu0 0.0
    %649 = vmatprep.subr.mxu0 0.0
    %650 = vmatpush1.xpose.msra.mxu0 0.0
    %651 = vmatprep.subr.mxu0 0.0
    %652 = vmatpush1.xpose.msra.mxu0 0.0
    %653 = vmatprep.subr.mxu0 0.0
    %654 = vmatpush1.xpose.msra.mxu0 0.0
    %655 = vmatprep.subr.mxu0 0.0
    %656 = vmatpush1.xpose.msra.mxu0 0.0
    %657 = vmatprep.subr.mxu0 0.0
    %658 = vmatpush1.xpose.msra.mxu0 0.0
    %659 = vmatprep.subr.mxu0 0.0
    %660 = vmatpush1.xpose.msra.mxu0 0.0
    %661 = vmatprep.subr.mxu0 0.0
    %662 = vmatpush1.xpose.msra.mxu0 0.0
    %663 = vmatprep.subr.mxu0 0.0
    %664 = vmatpush1.xpose.msra.mxu0 0.0
    %665 = vmatprep.subr.mxu0 0.0
    %666 = vmatpush1.xpose.msra.mxu0 0.0
    %667 = vmatprep.subr.mxu0 0.0
    %668 = vmatpush1.xpose.msra.mxu0 0.0
    %669 = vmatprep.subr.mxu0 0.0
    %670 = vmatpush1.xpose.msra.mxu0 0.0
    %671 = vmatprep.subr.mxu0 0.0
    %672 = vmatpush1.xpose.msra.mxu0 0.0
    %673 = vmatprep.subr.mxu0 0.0
    %674 = vmatpush1.xpose.msra.mxu0 0.0
    %675 = vmatprep.subr.mxu0 0.0
    %676 = vmatpush1.xpose.msra.mxu0 0.0
    %677 = vmatprep.subr.mxu0 0.0
    %678 = vmatpush1.xpose.msra.mxu0 0.0
    %679 = vmatprep.subr.mxu0 0.0
    %680 = vmatpush1.xpose.msra.mxu0 0.0
    %681 = vmatprep.subr.mxu0 0.0
    %682 = vmatpush1.xpose.msra.mxu0 0.0
    %683 = vmatprep.subr.mxu0 0.0
    %684 = vmatpush1.xpose.msra.mxu0 0.0
    %685 = vmatprep.subr.mxu0 0.0
    %686 = vmatpush1.xpose.msra.mxu0 0.0
    %687 = vmatprep.subr.mxu0 0.0
    %688 = vmatpush1.xpose.msra.mxu0 0.0
    %689 = vmatprep.subr.mxu0 0.0
    %690 = vmatpush1.xpose.msra.mxu0 0.0
    %691 = vmatprep.subr.mxu0 0.0
    %692 = vmatpush1.xpose.msra.mxu0 0.0
    %693 = vmatprep.subr.mxu0 0.0
    %694 = vmatpush1.xpose.msra.mxu0 0.0
    %695 = vmatprep.subr.mxu0 0.0
    %696 = vmatpush1.xpose.msra.mxu0 0.0
    %697 = vmatprep.subr.mxu0 0.0
    %698 = vmatpush1.xpose.msra.mxu0 0.0
    %699 = vmatprep.subr.mxu0 0.0
    %700 = vmatpush1.xpose.msra.mxu0 0.0
    %701 = vmatprep.mubr.f32.mxu0 0.0
    %702 = vmatmul.mubr.f32.gmra.mrb[0].mxu0 %v632
    %v703 = vpop.f32.mrb[0].mxu0
    %v704 = vadd.f32 0.0, %v703
    %v705 = vpop.f32.mrb[0].mxu0
    %706 = vdwg.mxu0
    %v708 = vsel %vm142, %v174, 0
    %v711 = vsel %vm142, %v133, 0
    %713 = vmatprep.subr.mxu0 0.0
    %714 = vmatpush1.xpose.msra.mxu0 %v711
    %715 = vmatprep.subr.mxu0 0.0
    %716 = vmatpush1.xpose.msra.mxu0 0.0
    %717 = vmatprep.subr.mxu0 0.0
    %718 = vmatpush1.xpose.msra.mxu0 0.0
    %719 = vmatprep.subr.mxu0 0.0
    %720 = vmatpush1.xpose.msra.mxu0 0.0
    %721 = vmatprep.subr.mxu0 0.0
    %722 = vmatpush1.xpose.msra.mxu0 0.0
    %723 = vmatprep.subr.mxu0 0.0
    %724 = vmatpush1.xpose.msra.mxu0 0.0
    %725 = vmatprep.subr.mxu0 0.0
    %726 = vmatpush1.xpose.msra.mxu0 0.0
    %727 = vmatprep.subr.mxu0 0.0
    %728 = vmatpush1.xpose.msra.mxu0 0.0
    %729 = vmatprep.subr.mxu0 0.0
    %730 = vmatpush1.xpose.msra.mxu0 0.0
    %731 = vmatprep.subr.mxu0 0.0
    %732 = vmatpush1.xpose.msra.mxu0 0.0
    %733 = vmatprep.subr.mxu0 0.0
    %734 = vmatpush1.xpose.msra.mxu0 0.0
    %735 = vmatprep.subr.mxu0 0.0
    %736 = vmatpush1.xpose.msra.mxu0 0.0
    %737 = vmatprep.subr.mxu0 0.0
    %738 = vmatpush1.xpose.msra.mxu0 0.0
    %739 = vmatprep.subr.mxu0 0.0
    %740 = vmatpush1.xpose.msra.mxu0 0.0
    %741 = vmatprep.subr.mxu0 0.0
    %742 = vmatpush1.xpose.msra.mxu0 0.0
    %743 = vmatprep.subr.mxu0 0.0
    %744 = vmatpush1.xpose.msra.mxu0 0.0
    %745 = vmatprep.subr.mxu0 0.0
    %746 = vmatpush1.xpose.msra.mxu0 0.0
    %747 = vmatprep.subr.mxu0 0.0
    %748 = vmatpush1.xpose.msra.mxu0 0.0
    %749 = vmatprep.subr.mxu0 0.0
    %750 = vmatpush1.xpose.msra.mxu0 0.0
    %751 = vmatprep.subr.mxu0 0.0
    %752 = vmatpush1.xpose.msra.mxu0 0.0
    %753 = vmatprep.subr.mxu0 0.0
    %754 = vmatpush1.xpose.msra.mxu0 0.0
    %755 = vmatprep.subr.mxu0 0.0
    %756 = vmatpush1.xpose.msra.mxu0 0.0
    %757 = vmatprep.subr.mxu0 0.0
    %758 = vmatpush1.xpose.msra.mxu0 0.0
    %759 = vmatprep.subr.mxu0 0.0
    %760 = vmatpush1.xpose.msra.mxu0 0.0
    %761 = vmatprep.subr.mxu0 0.0
    %762 = vmatpush1.xpose.msra.mxu0 0.0
    %763 = vmatprep.subr.mxu0 0.0
    %764 = vmatpush1.xpose.msra.mxu0 0.0
    %765 = vmatprep.subr.mxu0 0.0
    %766 = vmatpush1.xpose.msra.mxu0 0.0
    %767 = vmatprep.subr.mxu0 0.0
    %768 = vmatpush1.xpose.msra.mxu0 0.0
    %769 = vmatprep.subr.mxu0 0.0
    %770 = vmatpush1.xpose.msra.mxu0 0.0
    %771 = vmatprep.subr.mxu0 0.0
    %772 = vmatpush1.xpose.msra.mxu0 0.0
    %773 = vmatprep.subr.mxu0 0.0
    %774 = vmatpush1.xpose.msra.mxu0 0.0
    %775 = vmatprep.subr.mxu0 0.0
    %776 = vmatpush1.xpose.msra.mxu0 0.0
    %777 = vmatprep.mubr.f32.mxu0 0.0
    %778 = vmatmul.mubr.f32.gmra.mrb[0].mxu0 %v708
    %v779 = vpop.f32.mrb[0].mxu0
    %v780 = vadd.f32 0.0, %v779
    %v781 = vpop.f32.mrb[0].mxu0
    %782 = vdwg.mxu0
    %v783 = vld [vmem:[#allocation4] sm:$0x1]
    %v784 = vld [vmem:[#allocation4 + $0x1] sm:$0x1]
    %v785 = vld [vmem:[#allocation4 + $0x2] sm:$0x1]
    %v786 = vld [vmem:[#allocation4 + $0x3] sm:$0x1]
    %v787 = vld [vmem:[#allocation4 + $0x4] sm:$0x1]
    %v788 = vld [vmem:[#allocation4 + $0x5] sm:$0x1]
    %v789 = vld [vmem:[#allocation4 + $0x6] sm:$0x1]
    %v790 = vld [vmem:[#allocation4 + $0x7] sm:$0x1]
    %792 = vset.pattern.permute.xlu0 0
    %793 = vperm.xlu0 %792, %v783
    %v794 = vpop.permute.xlu0 %793
    %v796 = vlaneseq
    %v797 = vshrl.u32 %v796, 7
    %v798 = vsub.s32 0, %v797
    %v799 = vrot.slane %v794, %v798
    %801 = vset.pattern.permute.xlu0 0
    %802 = vperm.xlu0 %801, %v784
    %v803 = vpop.permute.xlu0 %802
    %v805 = vlaneseq
    %v806 = vshrl.u32 %v805, 7
    %v807 = vsub.s32 0, %v806
    %v808 = vrot.slane %v803, %v807
    %810 = vset.pattern.permute.xlu0 0
    %811 = vperm.xlu0 %810, %v785
    %v812 = vpop.permute.xlu0 %811
    %v814 = vlaneseq
    %v815 = vshrl.u32 %v814, 7
    %v816 = vsub.s32 0, %v815
    %v817 = vrot.slane %v812, %v816
    %819 = vset.pattern.permute.xlu0 0
    %820 = vperm.xlu0 %819, %v786
    %v821 = vpop.permute.xlu0 %820
    %v823 = vlaneseq
    %v824 = vshrl.u32 %v823, 7
    %v825 = vsub.s32 0, %v824
    %v826 = vrot.slane %v821, %v825
    %828 = vset.pattern.permute.xlu0 0
    %829 = vperm.xlu0 %828, %v787
    %v830 = vpop.permute.xlu0 %829
    %v832 = vlaneseq
    %v833 = vshrl.u32 %v832, 7
    %v834 = vsub.s32 0, %v833
    %v835 = vrot.slane %v830, %v834
    %837 = vset.pattern.permute.xlu0 0
    %838 = vperm.xlu0 %837, %v788
    %v839 = vpop.permute.xlu0 %838
    %v841 = vlaneseq
    %v842 = vshrl.u32 %v841, 7
    %v843 = vsub.s32 0, %v842
    %v844 = vrot.slane %v839, %v843
    %846 = vset.pattern.permute.xlu0 0
    %847 = vperm.xlu0 %846, %v789
    %v848 = vpop.permute.xlu0 %847
    %v850 = vlaneseq
    %v851 = vshrl.u32 %v850, 7
    %v852 = vsub.s32 0, %v851
    %v853 = vrot.slane %v848, %v852
    %855 = vset.pattern.permute.xlu0 0
    %856 = vperm.xlu0 %855, %v790
    %v857 = vpop.permute.xlu0 %856
    %v859 = vlaneseq
    %v860 = vshrl.u32 %v859, 7
    %v861 = vsub.s32 0, %v860
    %v862 = vrot.slane %v857, %v861
    %v863 = vmul.f32 %v799, %v145
    %v864 = vmul.f32 %v808, %v148
    %v865 = vmul.f32 %v817, %v151
    %v866 = vmul.f32 %v826, %v154
    %v867 = vmul.f32 %v835, %v157
    %v868 = vmul.f32 %v844, %v160
    %v869 = vmul.f32 %v853, %v163
    %v870 = vmul.f32 %v862, %v166
    %v871 = vrsqrt.pop %v863
    %v872 = vmul.f32 %v863, %v871
    %vm873 = vcmp.eq.f32.partialorder %v863, inf
    %v874 = vsel %vm873, %v863, %v872
    %vm875 = vcmp.eq.f32.partialorder %v863, 0.0
    %v876 = vand.u32 %v863, 2147483648
    %v877 = vsel %vm875, %v876, %v874
    %v878 = vrsqrt.pop %v864
    %v879 = vmul.f32 %v864, %v878
    %vm880 = vcmp.eq.f32.partialorder %v864, inf
    %v881 = vsel %vm880, %v864, %v879
    %vm882 = vcmp.eq.f32.partialorder %v864, 0.0
    %v883 = vand.u32 %v864, 2147483648
    %v884 = vsel %vm882, %v883, %v881
    %v885 = vrsqrt.pop %v865
    %v886 = vmul.f32 %v865, %v885
    %vm887 = vcmp.eq.f32.partialorder %v865, inf
    %v888 = vsel %vm887, %v865, %v886
    %vm889 = vcmp.eq.f32.partialorder %v865, 0.0
    %v890 = vand.u32 %v865, 2147483648
    %v891 = vsel %vm889, %v890, %v888
    %v892 = vrsqrt.pop %v866
    %v893 = vmul.f32 %v866, %v892
    %vm894 = vcmp.eq.f32.partialorder %v866, inf
    %v895 = vsel %vm894, %v866, %v893
    %vm896 = vcmp.eq.f32.partialorder %v866, 0.0
    %v897 = vand.u32 %v866, 2147483648
    %v898 = vsel %vm896, %v897, %v895
    %v899 = vrsqrt.pop %v867
    %v900 = vmul.f32 %v867, %v899
    %vm901 = vcmp.eq.f32.partialorder %v867, inf
    %v902 = vsel %vm901, %v867, %v900
    %vm903 = vcmp.eq.f32.partialorder %v867, 0.0
    %v904 = vand.u32 %v867, 2147483648
    %v905 = vsel %vm903, %v904, %v902
    %v906 = vrsqrt.pop %v868
    %v907 = vmul.f32 %v868, %v906
    %vm908 = vcmp.eq.f32.partialorder %v868, inf
    %v909 = vsel %vm908, %v868, %v907
    %vm910 = vcmp.eq.f32.partialorder %v868, 0.0
    %v911 = vand.u32 %v868, 2147483648
    %v912 = vsel %vm910, %v911, %v909
    %v913 = vrsqrt.pop %v869
    %v914 = vmul.f32 %v869, %v913
    %vm915 = vcmp.eq.f32.partialorder %v869, inf
    %v916 = vsel %vm915, %v869, %v914
    %vm917 = vcmp.eq.f32.partialorder %v869, 0.0
    %v918 = vand.u32 %v869, 2147483648
    %v919 = vsel %vm917, %v918, %v916
    %v920 = vrsqrt.pop %v870
    %v921 = vmul.f32 %v870, %v920
    %vm922 = vcmp.eq.f32.partialorder %v870, inf
    %v923 = vsel %vm922, %v870, %v921
    %vm924 = vcmp.eq.f32.partialorder %v870, 0.0
    %v925 = vand.u32 %v870, 2147483648
    %v926 = vsel %vm924, %v925, %v923
    %v927 = vmax.f32 %v877, 1e-08
    %v928 = vmax.f32 %v884, 1e-08
    %v929 = vmax.f32 %v891, 1e-08
    %v930 = vmax.f32 %v898, 1e-08
    %v931 = vmax.f32 %v905, 1e-08
    %v932 = vmax.f32 %v912, 1e-08
    %v933 = vmax.f32 %v919, 1e-08
    %v934 = vmax.f32 %v926, 1e-08
    %v943 = vlaneseq
    %v944 = vand.u32 %v943, 127
    %v945 = vlaneseq
    %v946 = vshrl.u32 %v945, 7
    %v947 = vsub.s32 %v944, %v946
    %v948 = vrot.slane %v927, %v947
    %v949 = vlaneseq
    %v950 = vshrl.u32 %v949, 7
    %v951 = vsub.s32 %v944, %v950
    %v952 = vrot.slane %v928, %v951
    %v953 = vlaneseq
    %v954 = vshrl.u32 %v953, 7
    %v955 = vsub.s32 %v944, %v954
    %v956 = vrot.slane %v929, %v955
    %v957 = vlaneseq
    %v958 = vshrl.u32 %v957, 7
    %v959 = vsub.s32 %v944, %v958
    %v960 = vrot.slane %v930, %v959
    %v961 = vlaneseq
    %v962 = vshrl.u32 %v961, 7
    %v963 = vsub.s32 %v944, %v962
    %v964 = vrot.slane %v931, %v963
    %v965 = vlaneseq
    %v966 = vshrl.u32 %v965, 7
    %v967 = vsub.s32 %v944, %v966
    %v968 = vrot.slane %v932, %v967
    %v969 = vlaneseq
    %v970 = vshrl.u32 %v969, 7
    %v971 = vsub.s32 %v944, %v970
    %v972 = vrot.slane %v933, %v971
    %v973 = vlaneseq
    %v974 = vshrl.u32 %v973, 7
    %v975 = vsub.s32 %v944, %v974
    %v976 = vrot.slane %v934, %v975
    %v985 = vrcp.pop %v948
    %v986 = vmul.f32 %v248, %v985
    %v987 = vrcp.pop %v952
    %v988 = vmul.f32 %v324, %v987
    %v989 = vrcp.pop %v956
    %v990 = vmul.f32 %v400, %v989
    %v991 = vrcp.pop %v960
    %v992 = vmul.f32 %v476, %v991
    %v993 = vrcp.pop %v964
    %v994 = vmul.f32 %v552, %v993
    %v995 = vrcp.pop %v968
    %v996 = vmul.f32 %v628, %v995
    %v997 = vrcp.pop %v972
    %v998 = vmul.f32 %v704, %v997
    %v999 = vrcp.pop %v976
    %v1000 = vmul.f32 %v780, %v999
    %vm1001 = vcmp.ge.f32.partialorder %v986, 0.9
    %vm1002 = vcmp.ge.f32.partialorder %v988, 0.9
    %vm1003 = vcmp.ge.f32.partialorder %v990, 0.9
    %vm1004 = vcmp.ge.f32.partialorder %v992, 0.9
    %vm1005 = vcmp.ge.f32.partialorder %v994, 0.9
    %vm1006 = vcmp.ge.f32.partialorder %v996, 0.9
    %vm1007 = vcmp.ge.f32.partialorder %v998, 0.9
    %vm1008 = vcmp.ge.f32.partialorder %v1000, 0.9
    %v1009 = vsel %vm1001, %v986, 0.0
    %v1010 = vsel %vm1002, %v988, 0.0
    %v1011 = vsel %vm1003, %v990, 0.0
    %v1012 = vsel %vm1004, %v992, 0.0
    %v1013 = vsel %vm1005, %v994, 0.0
    %v1014 = vsel %vm1006, %v996, 0.0
    %v1015 = vsel %vm1007, %v998, 0.0
    %v1016 = vsel %vm1008, %v1000, 0.0
    %v1017 = vld [vmem:[#allocation3] sm:$0x1]
    %v1018 = vld [vmem:[#allocation3 + $0x1] sm:$0x1]
    %v1019 = vld [vmem:[#allocation3 + $0x2] sm:$0x1]
    %v1020 = vld [vmem:[#allocation3 + $0x3] sm:$0x1]
    %v1021 = vld [vmem:[#allocation3 + $0x4] sm:$0x1]
    %v1022 = vld [vmem:[#allocation3 + $0x5] sm:$0x1]
    %v1023 = vld [vmem:[#allocation3 + $0x6] sm:$0x1]
    %v1024 = vld [vmem:[#allocation3 + $0x7] sm:$0x1]
    %vm1025 = vcmask 57344
    %v1026 = vsel %vm1025, %v1009, 0.0
    %1027 = vadd.xlane.f32.xlu0 %v1026
    %v1028 = vpop.xlane.xlu0 %1027
    %v1029 = vsel %vm1025, %v1010, 0.0
    %1030 = vadd.xlane.f32.xlu0 %v1029
    %v1031 = vpop.xlane.xlu0 %1030
    %v1032 = vsel %vm1025, %v1011, 0.0
    %1033 = vadd.xlane.f32.xlu0 %v1032
    %v1034 = vpop.xlane.xlu0 %1033
    %v1035 = vsel %vm1025, %v1012, 0.0
    %1036 = vadd.xlane.f32.xlu0 %v1035
    %v1037 = vpop.xlane.xlu0 %1036
    %v1038 = vsel %vm1025, %v1013, 0.0
    %1039 = vadd.xlane.f32.xlu0 %v1038
    %v1040 = vpop.xlane.xlu0 %1039
    %v1041 = vsel %vm1025, %v1014, 0.0
    %1042 = vadd.xlane.f32.xlu0 %v1041
    %v1043 = vpop.xlane.xlu0 %1042
    %v1044 = vsel %vm1025, %v1015, 0.0
    %1045 = vadd.xlane.f32.xlu0 %v1044
    %v1046 = vpop.xlane.xlu0 %1045
    %v1047 = vsel %vm1025, %v1016, 0.0
    %1048 = vadd.xlane.f32.xlu0 %v1047
    %v1049 = vpop.xlane.xlu0 %1048
    %v1050 = vadd.f32 %v1017, %v1028
    %v1051 = vadd.f32 %v1018, %v1031
    %v1052 = vadd.f32 %v1019, %v1034
    %v1053 = vadd.f32 %v1020, %v1037
    %v1054 = vadd.f32 %v1021, %v1040
    %v1055 = vadd.f32 %v1022, %v1043
    %v1056 = vadd.f32 %v1023, %v1046
    %v1057 = vadd.f32 %v1024, %v1049
    %vm1058 = vcmask 0
    %1059 = vst.msk [vmem:[#allocation3] sm:$0x1] %vm1058, %v1050
    %1060 = vst.msk [vmem:[#allocation3 + $0x1] sm:$0x1] %vm1058, %v1051
    %1061 = vst.msk [vmem:[#allocation3 + $0x2] sm:$0x1] %vm1058, %v1052
    %1062 = vst.msk [vmem:[#allocation3 + $0x3] sm:$0x1] %vm1058, %v1053
    %1063 = vst.msk [vmem:[#allocation3 + $0x4] sm:$0x1] %vm1058, %v1054
    %1064 = vst.msk [vmem:[#allocation3 + $0x5] sm:$0x1] %vm1058, %v1055
    %1065 = vst.msk [vmem:[#allocation3 + $0x6] sm:$0x1] %vm1058, %v1056
    %1066 = vst.msk [vmem:[#allocation3 + $0x7] sm:$0x1] %vm1058, %v1057
    %v1067 = vld [vmem:[#allocation2] sm:$0x1]
    %v1068 = vld [vmem:[#allocation2 + $0x1] sm:$0x1]
    %v1069 = vld [vmem:[#allocation2 + $0x2] sm:$0x1]
    %v1070 = vld [vmem:[#allocation2 + $0x3] sm:$0x1]
    %v1071 = vld [vmem:[#allocation2 + $0x4] sm:$0x1]
    %v1072 = vld [vmem:[#allocation2 + $0x5] sm:$0x1]
    %v1073 = vld [vmem:[#allocation2 + $0x6] sm:$0x1]
    %v1074 = vld [vmem:[#allocation2 + $0x7] sm:$0x1]
    %v1075 = vld [vmem:[#allocation10] sm:$0xff]
    %v1076 = vld [vmem:[#allocation10 + $0x8] sm:$0xff]
    %v1077 = vld [vmem:[#allocation10 + $0x10] sm:$0xff]
    %v1078 = vld [vmem:[#allocation10 + $0x18] sm:$0xff]
    %v1079 = vld [vmem:[#allocation10 + $0x20] sm:$0xff]
    %v1080 = vld [vmem:[#allocation10 + $0x28] sm:$0xff]
    %v1081 = vld [vmem:[#allocation10 + $0x30] sm:$0xff]
    %v1082 = vld [vmem:[#allocation10 + $0x38] sm:$0xff]
    %vm1083 = vcmask 64512
    %v1085 = vsel %vm1083, %v1009, 0
    %1087 = vmatprep.subr.mxu0 0.0
    %1088 = vmatpush1.msra.mxu0 %v1075
    %1089 = vmatprep.subr.mxu0 0.0
    %1090 = vmatpush1.msra.mxu0 0.0
    %1091 = vmatprep.subr.mxu0 0.0
    %1092 = vmatpush1.msra.mxu0 0.0
    %1093 = vmatprep.subr.mxu0 0.0
    %1094 = vmatpush1.msra.mxu0 0.0
    %1095 = vmatprep.subr.mxu0 0.0
    %1096 = vmatpush1.msra.mxu0 0.0
    %1097 = vmatprep.subr.mxu0 0.0
    %1098 = vmatpush1.msra.mxu0 0.0
    %1099 = vmatprep.subr.mxu0 0.0
    %1100 = vmatpush1.msra.mxu0 0.0
    %1101 = vmatprep.subr.mxu0 0.0
    %1102 = vmatpush1.msra.mxu0 0.0
    %1103 = vmatprep.subr.mxu0 0.0
    %1104 = vmatpush1.msra.mxu0 0.0
    %1105 = vmatprep.subr.mxu0 0.0
    %1106 = vmatpush1.msra.mxu0 0.0
    %1107 = vmatprep.subr.mxu0 0.0
    %1108 = vmatpush1.msra.mxu0 0.0
    %1109 = vmatprep.subr.mxu0 0.0
    %1110 = vmatpush1.msra.mxu0 0.0
    %1111 = vmatprep.subr.mxu0 0.0
    %1112 = vmatpush1.msra.mxu0 0.0
    %1113 = vmatprep.subr.mxu0 0.0
    %1114 = vmatpush1.msra.mxu0 0.0
    %1115 = vmatprep.subr.mxu0 0.0
    %1116 = vmatpush1.msra.mxu0 0.0
    %1117 = vmatprep.subr.mxu0 0.0
    %1118 = vmatpush1.msra.mxu0 0.0
    %1119 = vmatprep.subr.mxu0 0.0
    %1120 = vmatpush1.msra.mxu0 0.0
    %1121 = vmatprep.subr.mxu0 0.0
    %1122 = vmatpush1.msra.mxu0 0.0
    %1123 = vmatprep.subr.mxu0 0.0
    %1124 = vmatpush1.msra.mxu0 0.0
    %1125 = vmatprep.subr.mxu0 0.0
    %1126 = vmatpush1.msra.mxu0 0.0
    %1127 = vmatprep.subr.mxu0 0.0
    %1128 = vmatpush1.msra.mxu0 0.0
    %1129 = vmatprep.subr.mxu0 0.0
    %1130 = vmatpush1.msra.mxu0 0.0
    %1131 = vmatprep.subr.mxu0 0.0
    %1132 = vmatpush1.msra.mxu0 0.0
    %1133 = vmatprep.subr.mxu0 0.0
    %1134 = vmatpush1.msra.mxu0 0.0
    %1135 = vmatprep.subr.mxu0 0.0
    %1136 = vmatpush1.msra.mxu0 0.0
    %1137 = vmatprep.subr.mxu0 0.0
    %1138 = vmatpush1.msra.mxu0 0.0
    %1139 = vmatprep.subr.mxu0 0.0
    %1140 = vmatpush1.msra.mxu0 0.0
    %1141 = vmatprep.subr.mxu0 0.0
    %1142 = vmatpush1.msra.mxu0 0.0
    %1143 = vmatprep.subr.mxu0 0.0
    %1144 = vmatpush1.msra.mxu0 0.0
    %1145 = vmatprep.subr.mxu0 0.0
    %1146 = vmatpush1.msra.mxu0 0.0
    %1147 = vmatprep.subr.mxu0 0.0
    %1148 = vmatpush1.msra.mxu0 0.0
    %1149 = vmatprep.subr.mxu0 0.0
    %1150 = vmatpush1.msra.mxu0 0.0
    %1151 = vmatprep.mubr.f32.mxu0 0.0
    %1152 = vmatmul.mubr.f32.gmra.mrb[0].mxu0 %v1085
    %v1153 = vpop.f32.mrb[0].mxu0
    %v1154 = vadd.f32 0.0, %v1153
    %v1155 = vpop.f32.mrb[0].mxu0
    %1156 = vdwg.mxu0
    %v1158 = vsel %vm1083, %v1010, 0
    %1160 = vmatprep.subr.mxu0 0.0
    %1161 = vmatpush1.msra.mxu0 %v1076
    %1162 = vmatprep.subr.mxu0 0.0
    %1163 = vmatpush1.msra.mxu0 0.0
    %1164 = vmatprep.subr.mxu0 0.0
    %1165 = vmatpush1.msra.mxu0 0.0
    %1166 = vmatprep.subr.mxu0 0.0
    %1167 = vmatpush1.msra.mxu0 0.0
    %1168 = vmatprep.subr.mxu0 0.0
    %1169 = vmatpush1.msra.mxu0 0.0
    %1170 = vmatprep.subr.mxu0 0.0
    %1171 = vmatpush1.msra.mxu0 0.0
    %1172 = vmatprep.subr.mxu0 0.0
    %1173 = vmatpush1.msra.mxu0 0.0
    %1174 = vmatprep.subr.mxu0 0.0
    %1175 = vmatpush1.msra.mxu0 0.0
    %1176 = vmatprep.subr.mxu0 0.0
    %1177 = vmatpush1.msra.mxu0 0.0
    %1178 = vmatprep.subr.mxu0 0.0
    %1179 = vmatpush1.msra.mxu0 0.0
    %1180 = vmatprep.subr.mxu0 0.0
    %1181 = vmatpush1.msra.mxu0 0.0
    %1182 = vmatprep.subr.mxu0 0.0
    %1183 = vmatpush1.msra.mxu0 0.0
    %1184 = vmatprep.subr.mxu0 0.0
    %1185 = vmatpush1.msra.mxu0 0.0
    %1186 = vmatprep.subr.mxu0 0.0
    %1187 = vmatpush1.msra.mxu0 0.0
    %1188 = vmatprep.subr.mxu0 0.0
    %1189 = vmatpush1.msra.mxu0 0.0
    %1190 = vmatprep.subr.mxu0 0.0
    %1191 = vmatpush1.msra.mxu0 0.0
    %1192 = vmatprep.subr.mxu0 0.0
    %1193 = vmatpush1.msra.mxu0 0.0
    %1194 = vmatprep.subr.mxu0 0.0
    %1195 = vmatpush1.msra.mxu0 0.0
    %1196 = vmatprep.subr.mxu0 0.0
    %1197 = vmatpush1.msra.mxu0 0.0
    %1198 = vmatprep.subr.mxu0 0.0
    %1199 = vmatpush1.msra.mxu0 0.0
    %1200 = vmatprep.subr.mxu0 0.0
    %1201 = vmatpush1.msra.mxu0 0.0
    %1202 = vmatprep.subr.mxu0 0.0
    %1203 = vmatpush1.msra.mxu0 0.0
    %1204 = vmatprep.subr.mxu0 0.0
    %1205 = vmatpush1.msra.mxu0 0.0
    %1206 = vmatprep.subr.mxu0 0.0
    %1207 = vmatpush1.msra.mxu0 0.0
    %1208 = vmatprep.subr.mxu0 0.0
    %1209 = vmatpush1.msra.mxu0 0.0
    %1210 = vmatprep.subr.mxu0 0.0
    %1211 = vmatpush1.msra.mxu0 0.0
    %1212 = vmatprep.subr.mxu0 0.0
    %1213 = vmatpush1.msra.mxu0 0.0
    %1214 = vmatprep.subr.mxu0 0.0
    %1215 = vmatpush1.msra.mxu0 0.0
    %1216 = vmatprep.subr.mxu0 0.0
    %1217 = vmatpush1.msra.mxu0 0.0
    %1218 = vmatprep.subr.mxu0 0.0
    %1219 = vmatpush1.msra.mxu0 0.0
    %1220 = vmatprep.subr.mxu0 0.0
    %1221 = vmatpush1.msra.mxu0 0.0
    %1222 = vmatprep.subr.mxu0 0.0
    %1223 = vmatpush1.msra.mxu0 0.0
    %1224 = vmatprep.mubr.f32.mxu0 0.0
    %1225 = vmatmul.mubr.f32.gmra.mrb[0].mxu0 %v1158
    %v1226 = vpop.f32.mrb[0].mxu0
    %v1227 = vadd.f32 0.0, %v1226
    %v1228 = vpop.f32.mrb[0].mxu0
    %1229 = vdwg.mxu0
    %v1231 = vsel %vm1083, %v1011, 0
    %1233 = vmatprep.subr.mxu0 0.0
    %1234 = vmatpush1.msra.mxu0 %v1077
    %1235 = vmatprep.subr.mxu0 0.0
    %1236 = vmatpush1.msra.mxu0 0.0
    %1237 = vmatprep.subr.mxu0 0.0
    %1238 = vmatpush1.msra.mxu0 0.0
    %1239 = vmatprep.subr.mxu0 0.0
    %1240 = vmatpush1.msra.mxu0 0.0
    %1241 = vmatprep.subr.mxu0 0.0
    %1242 = vmatpush1.msra.mxu0 0.0
    %1243 = vmatprep.subr.mxu0 0.0
    %1244 = vmatpush1.msra.mxu0 0.0
    %1245 = vmatprep.subr.mxu0 0.0
    %1246 = vmatpush1.msra.mxu0 0.0
    %1247 = vmatprep.subr.mxu0 0.0
    %1248 = vmatpush1.msra.mxu0 0.0
    %1249 = vmatprep.subr.mxu0 0.0
    %1250 = vmatpush1.msra.mxu0 0.0
    %1251 = vmatprep.subr.mxu0 0.0
    %1252 = vmatpush1.msra.mxu0 0.0
    %1253 = vmatprep.subr.mxu0 0.0
    %1254 = vmatpush1.msra.mxu0 0.0
    %1255 = vmatprep.subr.mxu0 0.0
    %1256 = vmatpush1.msra.mxu0 0.0
    %1257 = vmatprep.subr.mxu0 0.0
    %1258 = vmatpush1.msra.mxu0 0.0
    %1259 = vmatprep.subr.mxu0 0.0
    %1260 = vmatpush1.msra.mxu0 0.0
    %1261 = vmatprep.subr.mxu0 0.0
    %1262 = vmatpush1.msra.mxu0 0.0
    %1263 = vmatprep.subr.mxu0 0.0
    %1264 = vmatpush1.msra.mxu0 0.0
    %1265 = vmatprep.subr.mxu0 0.0
    %1266 = vmatpush1.msra.mxu0 0.0
    %1267 = vmatprep.subr.mxu0 0.0
    %1268 = vmatpush1.msra.mxu0 0.0
    %1269 = vmatprep.subr.mxu0 0.0
    %1270 = vmatpush1.msra.mxu0 0.0
    %1271 = vmatprep.subr.mxu0 0.0
    %1272 = vmatpush1.msra.mxu0 0.0
    %1273 = vmatprep.subr.mxu0 0.0
    %1274 = vmatpush1.msra.mxu0 0.0
    %1275 = vmatprep.subr.mxu0 0.0
    %1276 = vmatpush1.msra.mxu0 0.0
    %1277 = vmatprep.subr.mxu0 0.0
    %1278 = vmatpush1.msra.mxu0 0.0
    %1279 = vmatprep.subr.mxu0 0.0
    %1280 = vmatpush1.msra.mxu0 0.0
    %1281 = vmatprep.subr.mxu0 0.0
    %1282 = vmatpush1.msra.mxu0 0.0
    %1283 = vmatprep.subr.mxu0 0.0
    %1284 = vmatpush1.msra.mxu0 0.0
    %1285 = vmatprep.subr.mxu0 0.0
    %1286 = vmatpush1.msra.mxu0 0.0
    %1287 = vmatprep.subr.mxu0 0.0
    %1288 = vmatpush1.msra.mxu0 0.0
    %1289 = vmatprep.subr.mxu0 0.0
    %1290 = vmatpush1.msra.mxu0 0.0
    %1291 = vmatprep.subr.mxu0 0.0
    %1292 = vmatpush1.msra.mxu0 0.0
    %1293 = vmatprep.subr.mxu0 0.0
    %1294 = vmatpush1.msra.mxu0 0.0
    %1295 = vmatprep.subr.mxu0 0.0
    %1296 = vmatpush1.msra.mxu0 0.0
    %1297 = vmatprep.mubr.f32.mxu0 0.0
    %1298 = vmatmul.mubr.f32.gmra.mrb[0].mxu0 %v1231
    %v1299 = vpop.f32.mrb[0].mxu0
    %v1300 = vadd.f32 0.0, %v1299
    %v1301 = vpop.f32.mrb[0].mxu0
    %1302 = vdwg.mxu0
    %v1304 = vsel %vm1083, %v1012, 0
    %1306 = vmatprep.subr.mxu0 0.0
    %1307 = vmatpush1.msra.mxu0 %v1078
    %1308 = vmatprep.subr.mxu0 0.0
    %1309 = vmatpush1.msra.mxu0 0.0
    %1310 = vmatprep.subr.mxu0 0.0
    %1311 = vmatpush1.msra.mxu0 0.0
    %1312 = vmatprep.subr.mxu0 0.0
    %1313 = vmatpush1.msra.mxu0 0.0
    %1314 = vmatprep.subr.mxu0 0.0
    %1315 = vmatpush1.msra.mxu0 0.0
    %1316 = vmatprep.subr.mxu0 0.0
    %1317 = vmatpush1.msra.mxu0 0.0
    %1318 = vmatprep.subr.mxu0 0.0
    %1319 = vmatpush1.msra.mxu0 0.0
    %1320 = vmatprep.subr.mxu0 0.0
    %1321 = vmatpush1.msra.mxu0 0.0
    %1322 = vmatprep.subr.mxu0 0.0
    %1323 = vmatpush1.msra.mxu0 0.0
    %1324 = vmatprep.subr.mxu0 0.0
    %1325 = vmatpush1.msra.mxu0 0.0
    %1326 = vmatprep.subr.mxu0 0.0
    %1327 = vmatpush1.msra.mxu0 0.0
    %1328 = vmatprep.subr.mxu0 0.0
    %1329 = vmatpush1.msra.mxu0 0.0
    %1330 = vmatprep.subr.mxu0 0.0
    %1331 = vmatpush1.msra.mxu0 0.0
    %1332 = vmatprep.subr.mxu0 0.0
    %1333 = vmatpush1.msra.mxu0 0.0
    %1334 = vmatprep.subr.mxu0 0.0
    %1335 = vmatpush1.msra.mxu0 0.0
    %1336 = vmatprep.subr.mxu0 0.0
    %1337 = vmatpush1.msra.mxu0 0.0
    %1338 = vmatprep.subr.mxu0 0.0
    %1339 = vmatpush1.msra.mxu0 0.0
    %1340 = vmatprep.subr.mxu0 0.0
    %1341 = vmatpush1.msra.mxu0 0.0
    %1342 = vmatprep.subr.mxu0 0.0
    %1343 = vmatpush1.msra.mxu0 0.0
    %1344 = vmatprep.subr.mxu0 0.0
    %1345 = vmatpush1.msra.mxu0 0.0
    %1346 = vmatprep.subr.mxu0 0.0
    %1347 = vmatpush1.msra.mxu0 0.0
    %1348 = vmatprep.subr.mxu0 0.0
    %1349 = vmatpush1.msra.mxu0 0.0
    %1350 = vmatprep.subr.mxu0 0.0
    %1351 = vmatpush1.msra.mxu0 0.0
    %1352 = vmatprep.subr.mxu0 0.0
    %1353 = vmatpush1.msra.mxu0 0.0
    %1354 = vmatprep.subr.mxu0 0.0
    %1355 = vmatpush1.msra.mxu0 0.0
    %1356 = vmatprep.subr.mxu0 0.0
    %1357 = vmatpush1.msra.mxu0 0.0
    %1358 = vmatprep.subr.mxu0 0.0
    %1359 = vmatpush1.msra.mxu0 0.0
    %1360 = vmatprep.subr.mxu0 0.0
    %1361 = vmatpush1.msra.mxu0 0.0
    %1362 = vmatprep.subr.mxu0 0.0
    %1363 = vmatpush1.msra.mxu0 0.0
    %1364 = vmatprep.subr.mxu0 0.0
    %1365 = vmatpush1.msra.mxu0 0.0
    %1366 = vmatprep.subr.mxu0 0.0
    %1367 = vmatpush1.msra.mxu0 0.0
    %1368 = vmatprep.subr.mxu0 0.0
    %1369 = vmatpush1.msra.mxu0 0.0
    %1370 = vmatprep.mubr.f32.mxu0 0.0
    %1371 = vmatmul.mubr.f32.gmra.mrb[0].mxu0 %v1304
    %v1372 = vpop.f32.mrb[0].mxu0
    %v1373 = vadd.f32 0.0, %v1372
    %v1374 = vpop.f32.mrb[0].mxu0
    %1375 = vdwg.mxu0
    %v1377 = vsel %vm1083, %v1013, 0
    %1379 = vmatprep.subr.mxu0 0.0
    %1380 = vmatpush1.msra.mxu0 %v1079
    %1381 = vmatprep.subr.mxu0 0.0
    %1382 = vmatpush1.msra.mxu0 0.0
    %1383 = vmatprep.subr.mxu0 0.0
    %1384 = vmatpush1.msra.mxu0 0.0
    %1385 = vmatprep.subr.mxu0 0.0
    %1386 = vmatpush1.msra.mxu0 0.0
    %1387 = vmatprep.subr.mxu0 0.0
    %1388 = vmatpush1.msra.mxu0 0.0
    %1389 = vmatprep.subr.mxu0 0.0
    %1390 = vmatpush1.msra.mxu0 0.0
    %1391 = vmatprep.subr.mxu0 0.0
    %1392 = vmatpush1.msra.mxu0 0.0
    %1393 = vmatprep.subr.mxu0 0.0
    %1394 = vmatpush1.msra.mxu0 0.0
    %1395 = vmatprep.subr.mxu0 0.0
    %1396 = vmatpush1.msra.mxu0 0.0
    %1397 = vmatprep.subr.mxu0 0.0
    %1398 = vmatpush1.msra.mxu0 0.0
    %1399 = vmatprep.subr.mxu0 0.0
    %1400 = vmatpush1.msra.mxu0 0.0
    %1401 = vmatprep.subr.mxu0 0.0
    %1402 = vmatpush1.msra.mxu0 0.0
    %1403 = vmatprep.subr.mxu0 0.0
    %1404 = vmatpush1.msra.mxu0 0.0
    %1405 = vmatprep.subr.mxu0 0.0
    %1406 = vmatpush1.msra.mxu0 0.0
    %1407 = vmatprep.subr.mxu0 0.0
    %1408 = vmatpush1.msra.mxu0 0.0
    %1409 = vmatprep.subr.mxu0 0.0
    %1410 = vmatpush1.msra.mxu0 0.0
    %1411 = vmatprep.subr.mxu0 0.0
    %1412 = vmatpush1.msra.mxu0 0.0
    %1413 = vmatprep.subr.mxu0 0.0
    %1414 = vmatpush1.msra.mxu0 0.0
    %1415 = vmatprep.subr.mxu0 0.0
    %1416 = vmatpush1.msra.mxu0 0.0
    %1417 = vmatprep.subr.mxu0 0.0
    %1418 = vmatpush1.msra.mxu0 0.0
    %1419 = vmatprep.subr.mxu0 0.0
    %1420 = vmatpush1.msra.mxu0 0.0
    %1421 = vmatprep.subr.mxu0 0.0
    %1422 = vmatpush1.msra.mxu0 0.0
    %1423 = vmatprep.subr.mxu0 0.0
    %1424 = vmatpush1.msra.mxu0 0.0
    %1425 = vmatprep.subr.mxu0 0.0
    %1426 = vmatpush1.msra.mxu0 0.0
    %1427 = vmatprep.subr.mxu0 0.0
    %1428 = vmatpush1.msra.mxu0 0.0
    %1429 = vmatprep.subr.mxu0 0.0
    %1430 = vmatpush1.msra.mxu0 0.0
    %1431 = vmatprep.subr.mxu0 0.0
    %1432 = vmatpush1.msra.mxu0 0.0
    %1433 = vmatprep.subr.mxu0 0.0
    %1434 = vmatpush1.msra.mxu0 0.0
    %1435 = vmatprep.subr.mxu0 0.0
    %1436 = vmatpush1.msra.mxu0 0.0
    %1437 = vmatprep.subr.mxu0 0.0
    %1438 = vmatpush1.msra.mxu0 0.0
    %1439 = vmatprep.subr.mxu0 0.0
    %1440 = vmatpush1.msra.mxu0 0.0
    %1441 = vmatprep.subr.mxu0 0.0
    %1442 = vmatpush1.msra.mxu0 0.0
    %1443 = vmatprep.mubr.f32.mxu0 0.0
    %1444 = vmatmul.mubr.f32.gmra.mrb[0].mxu0 %v1377
    %v1445 = vpop.f32.mrb[0].mxu0
    %v1446 = vadd.f32 0.0, %v1445
    %v1447 = vpop.f32.mrb[0].mxu0
    %1448 = vdwg.mxu0
    %v1450 = vsel %vm1083, %v1014, 0
    %1452 = vmatprep.subr.mxu0 0.0
    %1453 = vmatpush1.msra.mxu0 %v1080
    %1454 = vmatprep.subr.mxu0 0.0
    %1455 = vmatpush1.msra.mxu0 0.0
    %1456 = vmatprep.subr.mxu0 0.0
    %1457 = vmatpush1.msra.mxu0 0.0
    %1458 = vmatprep.subr.mxu0 0.0
    %1459 = vmatpush1.msra.mxu0 0.0
    %1460 = vmatprep.subr.mxu0 0.0
    %1461 = vmatpush1.msra.mxu0 0.0
    %1462 = vmatprep.subr.mxu0 0.0
    %1463 = vmatpush1.msra.mxu0 0.0
    %1464 = vmatprep.subr.mxu0 0.0
    %1465 = vmatpush1.msra.mxu0 0.0
    %1466 = vmatprep.subr.mxu0 0.0
    %1467 = vmatpush1.msra.mxu0 0.0
    %1468 = vmatprep.subr.mxu0 0.0
    %1469 = vmatpush1.msra.mxu0 0.0
    %1470 = vmatprep.subr.mxu0 0.0
    %1471 = vmatpush1.msra.mxu0 0.0
    %1472 = vmatprep.subr.mxu0 0.0
    %1473 = vmatpush1.msra.mxu0 0.0
    %1474 = vmatprep.subr.mxu0 0.0
    %1475 = vmatpush1.msra.mxu0 0.0
    %1476 = vmatprep.subr.mxu0 0.0
    %1477 = vmatpush1.msra.mxu0 0.0
    %1478 = vmatprep.subr.mxu0 0.0
    %1479 = vmatpush1.msra.mxu0 0.0
    %1480 = vmatprep.subr.mxu0 0.0
    %1481 = vmatpush1.msra.mxu0 0.0
    %1482 = vmatprep.subr.mxu0 0.0
    %1483 = vmatpush1.msra.mxu0 0.0
    %1484 = vmatprep.subr.mxu0 0.0
    %1485 = vmatpush1.msra.mxu0 0.0
    %1486 = vmatprep.subr.mxu0 0.0
    %1487 = vmatpush1.msra.mxu0 0.0
    %1488 = vmatprep.subr.mxu0 0.0
    %1489 = vmatpush1.msra.mxu0 0.0
    %1490 = vmatprep.subr.mxu0 0.0
    %1491 = vmatpush1.msra.mxu0 0.0
    %1492 = vmatprep.subr.mxu0 0.0
    %1493 = vmatpush1.msra.mxu0 0.0
    %1494 = vmatprep.subr.mxu0 0.0
    %1495 = vmatpush1.msra.mxu0 0.0
    %1496 = vmatprep.subr.mxu0 0.0
    %1497 = vmatpush1.msra.mxu0 0.0
    %1498 = vmatprep.subr.mxu0 0.0
    %1499 = vmatpush1.msra.mxu0 0.0
    %1500 = vmatprep.subr.mxu0 0.0
    %1501 = vmatpush1.msra.mxu0 0.0
    %1502 = vmatprep.subr.mxu0 0.0
    %1503 = vmatpush1.msra.mxu0 0.0
    %1504 = vmatprep.subr.mxu0 0.0
    %1505 = vmatpush1.msra.mxu0 0.0
    %1506 = vmatprep.subr.mxu0 0.0
    %1507 = vmatpush1.msra.mxu0 0.0
    %1508 = vmatprep.subr.mxu0 0.0
    %1509 = vmatpush1.msra.mxu0 0.0
    %1510 = vmatprep.subr.mxu0 0.0
    %1511 = vmatpush1.msra.mxu0 0.0
    %1512 = vmatprep.subr.mxu0 0.0
    %1513 = vmatpush1.msra.mxu0 0.0
    %1514 = vmatprep.subr.mxu0 0.0
    %1515 = vmatpush1.msra.mxu0 0.0
    %1516 = vmatprep.mubr.f32.mxu0 0.0
    %1517 = vmatmul.mubr.f32.gmra.mrb[0].mxu0 %v1450
    %v1518 = vpop.f32.mrb[0].mxu0
    %v1519 = vadd.f32 0.0, %v1518
    %v1520 = vpop.f32.mrb[0].mxu0
    %1521 = vdwg.mxu0
    %v1523 = vsel %vm1083, %v1015, 0
    %1525 = vmatprep.subr.mxu0 0.0
    %1526 = vmatpush1.msra.mxu0 %v1081
    %1527 = vmatprep.subr.mxu0 0.0
    %1528 = vmatpush1.msra.mxu0 0.0
    %1529 = vmatprep.subr.mxu0 0.0
    %1530 = vmatpush1.msra.mxu0 0.0
    %1531 = vmatprep.subr.mxu0 0.0
    %1532 = vmatpush1.msra.mxu0 0.0
    %1533 = vmatprep.subr.mxu0 0.0
    %1534 = vmatpush1.msra.mxu0 0.0
    %1535 = vmatprep.subr.mxu0 0.0
    %1536 = vmatpush1.msra.mxu0 0.0
    %1537 = vmatprep.subr.mxu0 0.0
    %1538 = vmatpush1.msra.mxu0 0.0
    %1539 = vmatprep.subr.mxu0 0.0
    %1540 = vmatpush1.msra.mxu0 0.0
    %1541 = vmatprep.subr.mxu0 0.0
    %1542 = vmatpush1.msra.mxu0 0.0
    %1543 = vmatprep.subr.mxu0 0.0
    %1544 = vmatpush1.msra.mxu0 0.0
    %1545 = vmatprep.subr.mxu0 0.0
    %1546 = vmatpush1.msra.mxu0 0.0
    %1547 = vmatprep.subr.mxu0 0.0
    %1548 = vmatpush1.msra.mxu0 0.0
    %1549 = vmatprep.subr.mxu0 0.0
    %1550 = vmatpush1.msra.mxu0 0.0
    %1551 = vmatprep.subr.mxu0 0.0
    %1552 = vmatpush1.msra.mxu0 0.0
    %1553 = vmatprep.subr.mxu0 0.0
    %1554 = vmatpush1.msra.mxu0 0.0
    %1555 = vmatprep.subr.mxu0 0.0
    %1556 = vmatpush1.msra.mxu0 0.0
    %1557 = vmatprep.subr.mxu0 0.0
    %1558 = vmatpush1.msra.mxu0 0.0
    %1559 = vmatprep.subr.mxu0 0.0
    %1560 = vmatpush1.msra.mxu0 0.0
    %1561 = vmatprep.subr.mxu0 0.0
    %1562 = vmatpush1.msra.mxu0 0.0
    %1563 = vmatprep.subr.mxu0 0.0
    %1564 = vmatpush1.msra.mxu0 0.0
    %1565 = vmatprep.subr.mxu0 0.0
    %1566 = vmatpush1.msra.mxu0 0.0
    %1567 = vmatprep.subr.mxu0 0.0
    %1568 = vmatpush1.msra.mxu0 0.0
    %1569 = vmatprep.subr.mxu0 0.0
    %1570 = vmatpush1.msra.mxu0 0.0
    %1571 = vmatprep.subr.mxu0 0.0
    %1572 = vmatpush1.msra.mxu0 0.0
    %1573 = vmatprep.subr.mxu0 0.0
    %1574 = vmatpush1.msra.mxu0 0.0
    %1575 = vmatprep.subr.mxu0 0.0
    %1576 = vmatpush1.msra.mxu0 0.0
    %1577 = vmatprep.subr.mxu0 0.0
    %1578 = vmatpush1.msra.mxu0 0.0
    %1579 = vmatprep.subr.mxu0 0.0
    %1580 = vmatpush1.msra.mxu0 0.0
    %1581 = vmatprep.subr.mxu0 0.0
    %1582 = vmatpush1.msra.mxu0 0.0
    %1583 = vmatprep.subr.mxu0 0.0
    %1584 = vmatpush1.msra.mxu0 0.0
    %1585 = vmatprep.subr.mxu0 0.0
    %1586 = vmatpush1.msra.mxu0 0.0
    %1587 = vmatprep.subr.mxu0 0.0
    %1588 = vmatpush1.msra.mxu0 0.0
    %1589 = vmatprep.mubr.f32.mxu0 0.0
    %1590 = vmatmul.mubr.f32.gmra.mrb[0].mxu0 %v1523
    %v1591 = vpop.f32.mrb[0].mxu0
    %v1592 = vadd.f32 0.0, %v1591
    %v1593 = vpop.f32.mrb[0].mxu0
    %1594 = vdwg.mxu0
    %v1596 = vsel %vm1083, %v1016, 0
    %1598 = vmatprep.subr.mxu0 0.0
    %1599 = vmatpush1.msra.mxu0 %v1082
    %1600 = vmatprep.subr.mxu0 0.0
    %1601 = vmatpush1.msra.mxu0 0.0
    %1602 = vmatprep.subr.mxu0 0.0
    %1603 = vmatpush1.msra.mxu0 0.0
    %1604 = vmatprep.subr.mxu0 0.0
    %1605 = vmatpush1.msra.mxu0 0.0
    %1606 = vmatprep.subr.mxu0 0.0
    %1607 = vmatpush1.msra.mxu0 0.0
    %1608 = vmatprep.subr.mxu0 0.0
    %1609 = vmatpush1.msra.mxu0 0.0
    %1610 = vmatprep.subr.mxu0 0.0
    %1611 = vmatpush1.msra.mxu0 0.0
    %1612 = vmatprep.subr.mxu0 0.0
    %1613 = vmatpush1.msra.mxu0 0.0
    %1614 = vmatprep.subr.mxu0 0.0
    %1615 = vmatpush1.msra.mxu0 0.0
    %1616 = vmatprep.subr.mxu0 0.0
    %1617 = vmatpush1.msra.mxu0 0.0
    %1618 = vmatprep.subr.mxu0 0.0
    %1619 = vmatpush1.msra.mxu0 0.0
    %1620 = vmatprep.subr.mxu0 0.0
    %1621 = vmatpush1.msra.mxu0 0.0
    %1622 = vmatprep.subr.mxu0 0.0
    %1623 = vmatpush1.msra.mxu0 0.0
    %1624 = vmatprep.subr.mxu0 0.0
    %1625 = vmatpush1.msra.mxu0 0.0
    %1626 = vmatprep.subr.mxu0 0.0
    %1627 = vmatpush1.msra.mxu0 0.0
    %1628 = vmatprep.subr.mxu0 0.0
    %1629 = vmatpush1.msra.mxu0 0.0
    %1630 = vmatprep.subr.mxu0 0.0
    %1631 = vmatpush1.msra.mxu0 0.0
    %1632 = vmatprep.subr.mxu0 0.0
    %1633 = vmatpush1.msra.mxu0 0.0
    %1634 = vmatprep.subr.mxu0 0.0
    %1635 = vmatpush1.msra.mxu0 0.0
    %1636 = vmatprep.subr.mxu0 0.0
    %1637 = vmatpush1.msra.mxu0 0.0
    %1638 = vmatprep.subr.mxu0 0.0
    %1639 = vmatpush1.msra.mxu0 0.0
    %1640 = vmatprep.subr.mxu0 0.0
    %1641 = vmatpush1.msra.mxu0 0.0
    %1642 = vmatprep.subr.mxu0 0.0
    %1643 = vmatpush1.msra.mxu0 0.0
    %1644 = vmatprep.subr.mxu0 0.0
    %1645 = vmatpush1.msra.mxu0 0.0
    %1646 = vmatprep.subr.mxu0 0.0
    %1647 = vmatpush1.msra.mxu0 0.0
    %1648 = vmatprep.subr.mxu0 0.0
    %1649 = vmatpush1.msra.mxu0 0.0
    %1650 = vmatprep.subr.mxu0 0.0
    %1651 = vmatpush1.msra.mxu0 0.0
    %1652 = vmatprep.subr.mxu0 0.0
    %1653 = vmatpush1.msra.mxu0 0.0
    %1654 = vmatprep.subr.mxu0 0.0
    %1655 = vmatpush1.msra.mxu0 0.0
    %1656 = vmatprep.subr.mxu0 0.0
    %1657 = vmatpush1.msra.mxu0 0.0
    %1658 = vmatprep.subr.mxu0 0.0
    %1659 = vmatpush1.msra.mxu0 0.0
    %1660 = vmatprep.subr.mxu0 0.0
    %1661 = vmatpush1.msra.mxu0 0.0
    %1662 = vmatprep.mubr.f32.mxu0 0.0
    %1663 = vmatmul.mubr.f32.gmra.mrb[0].mxu0 %v1596
    %v1664 = vpop.f32.mrb[0].mxu0
    %v1665 = vadd.f32 0.0, %v1664
    %v1666 = vpop.f32.mrb[0].mxu0
    %1667 = vdwg.mxu0
    %v1668 = vadd.f32 %v1067, %v1154
    %v1669 = vadd.f32 %v1068, %v1227
    %v1670 = vadd.f32 %v1069, %v1300
    %v1671 = vadd.f32 %v1070, %v1373
    %v1672 = vadd.f32 %v1071, %v1446
    %v1673 = vadd.f32 %v1072, %v1519
    %v1674 = vadd.f32 %v1073, %v1592
    %v1675 = vadd.f32 %v1074, %v1665
    %vm1676 = vcmask 253952
    %1677 = vst.msk [vmem:[#allocation2] sm:$0x1] %vm1676, %v1668
    %1678 = vst.msk [vmem:[#allocation2 + $0x1] sm:$0x1] %vm1676, %v1669
    %1679 = vst.msk [vmem:[#allocation2 + $0x2] sm:$0x1] %vm1676, %v1670
    %1680 = vst.msk [vmem:[#allocation2 + $0x3] sm:$0x1] %vm1676, %v1671
    %1681 = vst.msk [vmem:[#allocation2 + $0x4] sm:$0x1] %vm1676, %v1672
    %1682 = vst.msk [vmem:[#allocation2 + $0x5] sm:$0x1] %vm1676, %v1673
    %1683 = vst.msk [vmem:[#allocation2 + $0x6] sm:$0x1] %vm1676, %v1674
    %1684 = vst.msk [vmem:[#allocation2 + $0x7] sm:$0x1] %vm1676, %v1675
    // Predicated region
    $region30: #{tpu_custom_call.1} parent=1 // pred_check
      %p1685 = pneg %p56
    $region31: #{tpu_custom_call.1} parent=1 // pred_check_branch
      %1687 = sbr.rel (%p1685) target = $region33
    $region32: #{tpu_custom_call.1} parent=1 // pred_region
      %v1688 = vld [vmem:[#allocation2] sm:$0x1]
      %v1689 = vld [vmem:[#allocation2 + $0x1] sm:$0x1]
      %v1690 = vld [vmem:[#allocation2 + $0x2] sm:$0x1]
      %v1691 = vld [vmem:[#allocation2 + $0x3] sm:$0x1]
      %v1692 = vld [vmem:[#allocation2 + $0x4] sm:$0x1]
      %v1693 = vld [vmem:[#allocation2 + $0x5] sm:$0x1]
      %v1694 = vld [vmem:[#allocation2 + $0x6] sm:$0x1]
      %v1695 = vld [vmem:[#allocation2 + $0x7] sm:$0x1]
      %v1696 = vld [vmem:[#allocation3] sm:$0x1]
      %v1697 = vld [vmem:[#allocation3 + $0x1] sm:$0x1]
      %v1698 = vld [vmem:[#allocation3 + $0x2] sm:$0x1]
      %v1699 = vld [vmem:[#allocation3 + $0x3] sm:$0x1]
      %v1700 = vld [vmem:[#allocation3 + $0x4] sm:$0x1]
      %v1701 = vld [vmem:[#allocation3 + $0x5] sm:$0x1]
      %v1702 = vld [vmem:[#allocation3 + $0x6] sm:$0x1]
      %v1703 = vld [vmem:[#allocation3 + $0x7] sm:$0x1]
      %v1704 = vadd.f32 %v1696, 1e-08
      %v1705 = vadd.f32 %v1697, 1e-08
      %v1706 = vadd.f32 %v1698, 1e-08
      %v1707 = vadd.f32 %v1699, 1e-08
      %v1708 = vadd.f32 %v1700, 1e-08
      %v1709 = vadd.f32 %v1701, 1e-08
      %v1710 = vadd.f32 %v1702, 1e-08
      %v1711 = vadd.f32 %v1703, 1e-08
      %1713 = vset.pattern.permute.xlu0 0
      %1714 = vperm.xlu0 %1713, %v1704
      %v1715 = vpop.permute.xlu0 %1714
      %v1717 = vlaneseq
      %v1718 = vshrl.u32 %v1717, 7
      %v1719 = vsub.s32 0, %v1718
      %v1720 = vrot.slane %v1715, %v1719
      %1722 = vset.pattern.permute.xlu0 0
      %1723 = vperm.xlu0 %1722, %v1705
      %v1724 = vpop.permute.xlu0 %1723
      %v1726 = vlaneseq
      %v1727 = vshrl.u32 %v1726, 7
      %v1728 = vsub.s32 0, %v1727
      %v1729 = vrot.slane %v1724, %v1728
      %1731 = vset.pattern.permute.xlu0 0
      %1732 = vperm.xlu0 %1731, %v1706
      %v1733 = vpop.permute.xlu0 %1732
      %v1735 = vlaneseq
      %v1736 = vshrl.u32 %v1735, 7
      %v1737 = vsub.s32 0, %v1736
      %v1738 = vrot.slane %v1733, %v1737
      %1740 = vset.pattern.permute.xlu0 0
      %1741 = vperm.xlu0 %1740, %v1707
      %v1742 = vpop.permute.xlu0 %1741
      %v1744 = vlaneseq
      %v1745 = vshrl.u32 %v1744, 7
      %v1746 = vsub.s32 0, %v1745
      %v1747 = vrot.slane %v1742, %v1746
      %1749 = vset.pattern.permute.xlu0 0
      %1750 = vperm.xlu0 %1749, %v1708
      %v1751 = vpop.permute.xlu0 %1750
      %v1753 = vlaneseq
      %v1754 = vshrl.u32 %v1753, 7
      %v1755 = vsub.s32 0, %v1754
      %v1756 = vrot.slane %v1751, %v1755
      %1758 = vset.pattern.permute.xlu0 0
      %1759 = vperm.xlu0 %1758, %v1709
      %v1760 = vpop.permute.xlu0 %1759
      %v1762 = vlaneseq
      %v1763 = vshrl.u32 %v1762, 7
      %v1764 = vsub.s32 0, %v1763
      %v1765 = vrot.slane %v1760, %v1764
      %1767 = vset.pattern.permute.xlu0 0
      %1768 = vperm.xlu0 %1767, %v1710
      %v1769 = vpop.permute.xlu0 %1768
      %v1771 = vlaneseq
      %v1772 = vshrl.u32 %v1771, 7
      %v1773 = vsub.s32 0, %v1772
      %v1774 = vrot.slane %v1769, %v1773
      %1776 = vset.pattern.permute.xlu0 0
      %1777 = vperm.xlu0 %1776, %v1711
      %v1778 = vpop.permute.xlu0 %1777
      %v1780 = vlaneseq
      %v1781 = vshrl.u32 %v1780, 7
      %v1782 = vsub.s32 0, %v1781
      %v1783 = vrot.slane %v1778, %v1782
      %v1784 = vrcp.pop %v1720
      %v1785 = vmul.f32 %v1688, %v1784
      %v1786 = vrcp.pop %v1729
      %v1787 = vmul.f32 %v1689, %v1786
      %v1788 = vrcp.pop %v1738
      %v1789 = vmul.f32 %v1690, %v1788
      %v1790 = vrcp.pop %v1747
      %v1791 = vmul.f32 %v1691, %v1790
      %v1792 = vrcp.pop %v1756
      %v1793 = vmul.f32 %v1692, %v1792
      %v1794 = vrcp.pop %v1765
      %v1795 = vmul.f32 %v1693, %v1794
      %v1796 = vrcp.pop %v1774
      %v1797 = vmul.f32 %v1694, %v1796
      %v1798 = vrcp.pop %v1783
      %v1799 = vmul.f32 %v1695, %v1798
      %1800 = vst.msk [vmem:[#allocation11] sm:$0x1] %vm1676, %v1785
      %1801 = vst.msk [vmem:[#allocation11 + $0x1] sm:$0x1] %vm1676, %v1787
      %1802 = vst.msk [vmem:[#allocation11 + $0x2] sm:$0x1] %vm1676, %v1789
      %1803 = vst.msk [vmem:[#allocation11 + $0x3] sm:$0x1] %vm1676, %v1791
      %1804 = vst.msk [vmem:[#allocation11 + $0x4] sm:$0x1] %vm1676, %v1793
      %1805 = vst.msk [vmem:[#allocation11 + $0x5] sm:$0x1] %vm1676, %v1795
      %1806 = vst.msk [vmem:[#allocation11 + $0x6] sm:$0x1] %vm1676, %v1797
      %1807 = vst.msk [vmem:[#allocation11 + $0x7] sm:$0x1] %vm1676, %v1799
    $region33: #{tpu_custom_call.1} parent=1 // pred_fallthru
      _
    // Predicated region
    $region34: #{tpu_custom_call.1} parent=1 // pred_check
      _
    $region35: #{tpu_custom_call.1} parent=1 // pred_check_branch
      %1809 = sbr.rel (0) target = $region37
    $region36: #{tpu_custom_call.1} parent=1 // pred_region
      %s1811 = ssub.s32 128, 128
      %1812 = vsyncadd [#allocation7], %s1811
      %s1813 = sshll.u32 [#allocation11], 4
      %s1814 = int_to_ptr.vmem [resolvable:$true] %s1813
      %1819 = dma.vmem_to_hbm [thread:$0]  %s1814, 128, %s3, [#allocation7], 16, 16, 1
    $region37: #{tpu_custom_call.1} parent=1 // pred_fallthru
      _
    // Predicated region
    $region38: #{tpu_custom_call.1} parent=1 // pred_check
      _
    $region39: #{tpu_custom_call.1} parent=1 // pred_check_branch
      %1821 = sbr.rel (0) target = $region41
    $region40: #{tpu_custom_call.1} parent=1 // pred_region
      %1822 = dma.done [#allocation7], 128
    $region41: #{tpu_custom_call.1} parent=1 // pred_fallthru
      _
    %1823 = vsyncpa [#allocation6], 1
    %1824 = vsyncpa [#allocation9], 1
    %1825 = vsyncpa [#allocation7], 1

</llo_original>
